<compile_context>
chip_gen: v7x
topology: tpu7x:2x2x1
jax: 0.10.0
libtpu: 0.0.40
codegen_flags: <defaults>
</compile_context>

<pallas_src>
import math
import functools

import jax
import jax.numpy as jnp
from jax.experimental import pallas as pl
from jax.experimental.pallas import tpu as pltpu


# -------------------------- kernel --------------------------

def _layernorm(x, gamma, beta, eps=1e-6):
    # Biased variance, matching PyTorch nn.LayerNorm.
    mean = jnp.mean(x, axis=-1, keepdims=True)
    var = jnp.mean((x - mean) ** 2, axis=-1, keepdims=True)
    return (x - mean) * jax.lax.rsqrt(var + eps) * gamma + beta


def encoder_layer_kernel(x_ref, bias_ref,
                         wqkv_ref, wo_ref,
                         ln1_g_ref, ln1_b_ref,
                         w1_ref, b1_ref, w2_ref, b2_ref,
                         ln2_g_ref, ln2_b_ref,
                         out_ref,
                         res_ref,
                         *, num_heads):
    """One encoder layer per grid step; grid = (batch, layer)."""
    layer = pl.program_id(1)
    bf16 = jnp.bfloat16

    # Initialize the VMEM-resident residual stream from the input at layer 0.
    @pl.when(layer == 0)
    def _():
        res_ref[...] = x_ref[0].astype(jnp.float32)

    S, D = res_ref.shape
    H = num_heads
    Dh = D // H
    scale = 1.0 / math.sqrt(Dh)

    x = res_ref[...]                              # (S, D) f32 residual stream
    bias = bias_ref[0].astype(jnp.float32)        # (S, S) additive mask bias

    # ---- multi-head self-attention (bf16 MXU operands, f32 accumulation) ----
    x_bf = x.astype(bf16)
    qkv = jnp.dot(x_bf, wqkv_ref[0], preferred_element_type=jnp.float32)  # (S, 3D)

    # 1/sqrt(Dh) folded into q (cheaper than scaling the (H,S,S) scores).
    q = (qkv[:, :D] * scale).reshape(S, H, Dh).astype(bf16)
    k = qkv[:, D:2 * D].reshape(S, H, Dh).astype(bf16)
    v = qkv[:, 2 * D:].reshape(S, H, Dh).astype(bf16)

    scores = jnp.einsum("qhd,khd->hqk", q, k,
                        preferred_element_type=jnp.float32)   # (H, S, S)
    scores = scores + bias                         # masked_fill_ as additive bias
    scores = scores - jnp.max(scores, axis=-1, keepdims=True)
    p = jnp.exp(scores)
    p = p / jnp.sum(p, axis=-1, keepdims=True)     # exact softmax normalization

    ctx = jnp.einsum("hqk,khd->qhd", p.astype(bf16), v,
                     preferred_element_type=jnp.float32)       # (S, H, Dh)
    ctx = ctx.reshape(S, D)
    attn_out = jnp.dot(ctx.astype(bf16), wo_ref[0],
                       preferred_element_type=jnp.float32)

    # dropout == identity (inference); residual + LayerNorm (post-LN)
    h1 = _layernorm(attn_out + x, ln1_g_ref[0], ln1_b_ref[0])

    # ---- feed-forward ----
    f = jnp.dot(h1.astype(bf16), w1_ref[0],
                preferred_element_type=jnp.float32) + b1_ref[0]
    f = jnp.maximum(f, 0.0)                        # ReLU
    f = jnp.dot(f.astype(bf16), w2_ref[0],
                preferred_element_type=jnp.float32) + b2_ref[0]

    x_new = _layernorm(f + h1, ln2_g_ref[0], ln2_b_ref[0])
    res_ref[...] = x_new

    @pl.when(layer == pl.num_programs(1) - 1)
    def _():
        out_ref[0] = x_new.astype(out_ref.dtype)


# -------------------------- wrapper --------------------------

def transformer_encoder(x, mask, layer_params, num_heads):
    B, S, D = x.shape
    L = len(layer_params)
    F = layer_params[0]["w1"].shape[1]

    stack = lambda name: jnp.stack([p[name] for p in layer_params], axis=0)

    # Fused QKV weight (L, D, 3D); all matmul weights in bf16 (MXU operands,
    # f32 accumulation inside the kernel).
    wqkv = jnp.concatenate([stack("wq"), stack("wk"), stack("wv")],
                           axis=-1).astype(jnp.bfloat16)            # (L, D, 3D)
    wo = stack("wo").astype(jnp.bfloat16)                            # (L, D, D)
    w1 = stack("w1").astype(jnp.bfloat16)                            # (L, D, F)
    w2 = stack("w2").astype(jnp.bfloat16)                            # (L, F, D)
    ln1_g, ln1_b = stack("ln1_g"), stack("ln1_b")                    # (L, 1, D)
    ln2_g, ln2_b = stack("ln2_g"), stack("ln2_b")                    # (L, 1, D)
    b1, b2 = stack("b1"), stack("b2")                                # (L,1,F),(L,1,D)

    # Additive attention bias (0.0 keep / ~-1e9 masked), shipped as bf16 to
    # halve the O(S^2) mask HBM traffic.
    bias = (mask * jnp.float32(-1e9)).astype(jnp.bfloat16)

    kernel = functools.partial(encoder_layer_kernel, num_heads=num_heads)

    def batch_spec(shape):
        # per-batch blocks; constant across the layer axis => DMA'd once per b
        return pl.BlockSpec((1,) + shape[1:], lambda b, l: (b,) + (0,) * (len(shape) - 1))

    def layer_spec(arr):
        # per-layer weight blocks; only one layer resident at a time, the next
        # layer's DMA pipelines under the current layer's compute.
        return pl.BlockSpec((1,) + arr.shape[1:], lambda b, l: (l, 0, 0))

    # VMEM budget: double-buffered per-step blocks + residual scratch +
    # compiler headroom, capped ~40 MiB (safe against v7x's 64 MiB physical).
    per_layer_weight_bytes = 2 * (D * 3 * D + D * D + D * F + F * D)
    per_step_bytes = (4 * S * D + 2 * S * S + 4 * S * D
                      + per_layer_weight_bytes + 4 * (4 * D + 2 * F))
    vmem_limit = int(min(max(2 * per_step_bytes + 4 * S * D + (8 << 20), 16 << 20),
                         40 << 20))

    return pl.pallas_call(
        kernel,
        out_shape=jax.ShapeDtypeStruct((B, S, D), x.dtype),
        grid=(B, L),                                   # batch outer, layer inner
        in_specs=[
            batch_spec((B, S, D)),                     # x
            batch_spec((B, S, S)),                     # additive mask bias (bf16)
            layer_spec(wqkv), layer_spec(wo),
            layer_spec(ln1_g), layer_spec(ln1_b),
            layer_spec(w1), layer_spec(b1),
            layer_spec(w2), layer_spec(b2),
            layer_spec(ln2_g), layer_spec(ln2_b),
        ],
        out_specs=pl.BlockSpec((1, S, D), lambda b, l: (b, 0, 0)),
        scratch_shapes=[pltpu.VMEM((S, D), jnp.float32)],   # residual stream
        compiler_params=pltpu.CompilerParams(
            dimension_semantics=("parallel", "arbitrary"),
            vmem_limit_bytes=vmem_limit),
    )(x, bias, wqkv, wo, ln1_g, ln1_b, w1, b1, w2, b2, ln2_g, ln2_b)


# -------------------------- params / references --------------------------

def _xavier(key, shape):
    fan_in, fan_out = shape
    bound = math.sqrt(6.0 / (fan_in + fan_out))
    return jax.random.uniform(key, shape, jnp.float32, -bound, bound)


def make_layer_params(key, d_model, dim_feedforward):
    ks = jax.random.split(key, 6)
    return {
        # weights stored transposed relative to torch nn.Linear: (in, out)
        "wq": _xavier(ks[0], (d_model, d_model)),
        "wk": _xavier(ks[1], (d_model, d_model)),
        "wv": _xavier(ks[2], (d_model, d_model)),
        "wo": _xavier(ks[3], (d_model, d_model)),
        "ln1_g": jnp.ones((1, d_model), jnp.float32),
        "ln1_b": jnp.zeros((1, d_model), jnp.float32),
        "w1": _xavier(ks[4], (d_model, dim_feedforward)),
        "b1": jnp.zeros((1, dim_feedforward), jnp.float32),
        "w2": _xavier(ks[5], (dim_feedforward, d_model)),
        "b2": jnp.zeros((1, d_model), jnp.float32),
        "ln2_g": jnp.ones((1, d_model), jnp.float32),
        "ln2_b": jnp.zeros((1, d_model), jnp.float32),
    }


def ref_encoder_mixed(x, bias, layer_params, num_heads):
    """Pure-JAX reference mirroring the kernel's exact op sequence
    (fused bf16 QKV, f32 accumulation, additive bias, exact softmax)."""
    bf16 = jnp.bfloat16
    B, S, D = x.shape
    H = num_heads
    Dh = D // H
    scale = 1.0 / math.sqrt(Dh)

    def ln(h, g, b):
        m = jnp.mean(h, -1, keepdims=True)
        v = jnp.mean((h - m) ** 2, -1, keepdims=True)
        return (h - m) * jax.lax.rsqrt(v + 1e-6) * g + b

    out = x.astype(jnp.float32)
    for p in layer_params:
        wqkv = jnp.concatenate([p["wq"], p["wk"], p["wv"]], axis=-1).astype(bf16)
        xb = out.astype(bf16)
        qkv = jnp.einsum("bsd,df->bsf", xb, wqkv, preferred_element_type=jnp.float32)
        q = (qkv[..., :D] * scale).reshape(B, S, H, Dh).astype(bf16)
        k = qkv[..., D:2 * D].reshape(B, S, H, Dh).astype(bf16)
        v = qkv[..., 2 * D:].reshape(B, S, H, Dh).astype(bf16)
        scores = jnp.einsum("bqhd,bkhd->bhqk", q, k,
                            preferred_element_type=jnp.float32)
        scores = scores + bias[:, None, :, :]
        scores = scores - jnp.max(scores, axis=-1, keepdims=True)
        pr = jnp.exp(scores)
        pr = pr / jnp.sum(pr, axis=-1, keepdims=True)
        ctx = jnp.einsum("bhqk,bkhd->bqhd", pr.astype(bf16), v,
                         preferred_element_type=jnp.float32).reshape(B, S, D)
        attn_out = jnp.einsum("bsd,df->bsf", ctx.astype(bf16),
                              p["wo"].astype(bf16),
                              preferred_element_type=jnp.float32)
        h1 = ln(attn_out + out, p["ln1_g"], p["ln1_b"])
        f = jnp.einsum("bsd,df->bsf", h1.astype(bf16), p["w1"].astype(bf16),
                       preferred_element_type=jnp.float32) + p["b1"]
        f = jnp.maximum(f, 0.0)
        f = jnp.einsum("bsf,fd->bsd", f.astype(bf16), p["w2"].astype(bf16),
                       preferred_element_type=jnp.float32) + p["b2"]
        out = ln(f + h1, p["ln2_g"], p["ln2_b"])
    return out


def ref_encoder_f32(x, mask, layer_params, num_heads):
    """Full-f32 reference mirroring the PyTorch forward (dropout = identity)."""
    B, S, D = x.shape
    H = num_heads
    Dh = D // H

    def ln(h, g, b):
        m = jnp.mean(h, -1, keepdims=True)
        v = jnp.mean((h - m) ** 2, -1, keepdims=True)
        return (h - m) / jnp.sqrt(v + 1e-6) * g + b

    out = x
    for p in layer_params:
        q = (out @ p["wq"]).reshape(B, S, H, Dh).transpose(0, 2, 1, 3)
        k = (out @ p["wk"]).reshape(B, S, H, Dh).transpose(0, 2, 1, 3)
        v = (out @ p["wv"]).reshape(B, S, H, Dh).transpose(0, 2, 1, 3)
        scores = jnp.einsum("bhqd,bhkd->bhqk", q, k) / math.sqrt(Dh)
        scores = jnp.where(mask[:, None] > 0.5, -1e9, scores)
        attn = jax.nn.softmax(scores, axis=-1)
        ctx = jnp.einsum("bhqk,bhkd->bhqd", attn, v)
        ctx = ctx.transpose(0, 2, 1, 3).reshape(B, S, D)
        attn_out = ctx @ p["wo"]
        h1 = ln(attn_out + out, p["ln1_g"], p["ln1_b"])
        f = jnp.maximum(h1 @ p["w1"] + p["b1"], 0.0)
        f = f @ p["w2"] + p["b2"]
        out = ln(f + h1, p["ln2_g"], p["ln2_b"])
    return out


# -------------------------- main --------------------------

if __name__ == "__main__":
    B, S, D = 2, 8, 32
    NUM_HEADS = 4
    DIM_FF = 64
    NUM_LAYERS = 2

    root = jax.random.PRNGKey(0)
    k_x, k_layers = jax.random.split(root)
    x = jax.random.normal(k_x, (B, S, D), jnp.float32)

    # mask: 1.0 => masked.  Mask the last two key positions.
    mask = jnp.zeros((B, S, S), jnp.float32).at[:, :, -2:].set(1.0)

    layer_keys = jax.random.split(k_layers, NUM_LAYERS)
    layer_params = [make_layer_params(k, D, DIM_FF) for k in layer_keys]

    out = transformer_encoder(x, mask, layer_params, NUM_HEADS)
    out = jax.block_until_ready(out)
    assert out.shape == (B, S, D)

    # Structural check: reference with the identical bf16-operand / f32-accum
    # op sequence (and the same bf16-quantized additive bias).  Expected
    # deviation is accumulation-order-level (~1e-5); tolerance is generous.
    bias_mixed = (mask * jnp.float32(-1e9)).astype(jnp.bfloat16).astype(jnp.float32)
    ref_mixed = ref_encoder_mixed(x, bias_mixed, layer_params, NUM_HEADS)
    assert jnp.allclose(out, ref_mixed, atol=2e-2, rtol=2e-2), \
        "mismatch vs mixed-precision reference"

    # PyTorch-parity check: full-f32 reference with masked_fill semantics;
    # looser tolerance accounts for the bf16 MXU operands used in the kernel.
    ref_f32 = ref_encoder_f32(x, mask, layer_params, NUM_HEADS)
    assert jnp.allclose(out, ref_f32, atol=1e-1, rtol=1e-1), \
        "mismatch vs f32 reference"

    # TODO(synk): nn.Dropout is treated as identity (inference mode); no
    # training-mode RNG parity is provided.
    print("KERNEL_OK")
</pallas_src>

<mosaic_0001>
module attributes {stable_mosaic.version = 11 : i64} {
  func.func @encoder_layer_kernel(%arg0: i32, %arg1: i32, %arg2: memref<1x8x32xf32, #tpu.memory_space<vmem>>, %arg3: memref<1x8x8xbf16, #tpu.memory_space<vmem>>, %arg4: memref<1x32x96xbf16, #tpu.memory_space<vmem>>, %arg5: memref<1x32x32xbf16, #tpu.memory_space<vmem>>, %arg6: memref<1x1x32xf32, #tpu.memory_space<vmem>>, %arg7: memref<1x1x32xf32, #tpu.memory_space<vmem>>, %arg8: memref<1x32x64xbf16, #tpu.memory_space<vmem>>, %arg9: memref<1x1x64xf32, #tpu.memory_space<vmem>>, %arg10: memref<1x64x32xbf16, #tpu.memory_space<vmem>>, %arg11: memref<1x1x32xf32, #tpu.memory_space<vmem>>, %arg12: memref<1x1x32xf32, #tpu.memory_space<vmem>>, %arg13: memref<1x1x32xf32, #tpu.memory_space<vmem>>, %arg14: memref<1x8x32xf32, #tpu.memory_space<vmem>>, %arg15: memref<8x32xf32, #tpu.memory_space<vmem>>) attributes {dimension_semantics = [#tpu.dimension_semantics<parallel>, #tpu.dimension_semantics<arbitrary>], iteration_bounds = array<i64: 2, 2>, scalar_prefetch = 0 : i64, scratch_operands = 1 : i64, tpu.core_type = #tpu.core_type<tc>, window_params = [{transform_indices = @transform_0, window_bounds = array<i64: 1, 8, 32>}, {transform_indices = @transform_1, window_bounds = array<i64: 1, 8, 8>}, {transform_indices = @transform_2, window_bounds = array<i64: 1, 32, 96>}, {transform_indices = @transform_3, window_bounds = array<i64: 1, 32, 32>}, {transform_indices = @transform_4, window_bounds = array<i64: 1, 1, 32>}, {transform_indices = @transform_5, window_bounds = array<i64: 1, 1, 32>}, {transform_indices = @transform_6, window_bounds = array<i64: 1, 32, 64>}, {transform_indices = @transform_7, window_bounds = array<i64: 1, 1, 64>}, {transform_indices = @transform_8, window_bounds = array<i64: 1, 64, 32>}, {transform_indices = @transform_9, window_bounds = array<i64: 1, 1, 32>}, {transform_indices = @transform_10, window_bounds = array<i64: 1, 1, 32>}, {transform_indices = @transform_11, window_bounds = array<i64: 1, 1, 32>}, {transform_indices = @transform_12, window_bounds = array<i64: 1, 8, 32>}]} {
    %c0_i32 = arith.constant 0 : i32
    %0 = arith.cmpi eq, %arg1, %c0_i32 : i32
    %1 = arith.extui %0 : i1 to i32
    %c0_i32_0 = arith.constant 0 : i32
    %2 = arith.cmpi ne, %1, %c0_i32_0 : i32
    scf.if %2 {
      %c0_57 = arith.constant 0 : index
      %c0_58 = arith.constant 0 : index
      %c0_59 = arith.constant 0 : index
      %119 = vector.load %arg2[%c0_57, %c0_58, %c0_59] : memref<1x8x32xf32, #tpu.memory_space<vmem>>, vector<1x8x32xf32>
      %120 = vector.shape_cast %119 : vector<1x8x32xf32> to vector<8x32xf32>
      %c0_60 = arith.constant 0 : index
      %c0_61 = arith.constant 0 : index
      %121 = vector.load %arg15[%c0_60, %c0_61] : memref<8x32xf32, #tpu.memory_space<vmem>>, vector<8x32xf32>
      tpu.vector_store %arg15[%c0_60, %c0_61], %120 {strides = array<i32>} : memref<8x32xf32, #tpu.memory_space<vmem>>, vector<8x32xf32>,
    } else {
    }
    %c0 = arith.constant 0 : index
    %c0_1 = arith.constant 0 : index
    %3 = vector.load %arg15[%c0, %c0_1] : memref<8x32xf32, #tpu.memory_space<vmem>>, vector<8x32xf32>
    %c0_2 = arith.constant 0 : index
    %c0_3 = arith.constant 0 : index
    %c0_4 = arith.constant 0 : index
    %4 = vector.load %arg3[%c0_2, %c0_3, %c0_4] : memref<1x8x8xbf16, #tpu.memory_space<vmem>>, vector<1x8x8xbf16>
    %5 = vector.shape_cast %4 : vector<1x8x8xbf16> to vector<8x8xbf16>
    %6 = arith.extf %5 : vector<8x8xbf16> to vector<8x8xf32>
    %7 = arith.truncf %3 : vector<8x32xf32> to vector<8x32xbf16>
    %c0_5 = arith.constant 0 : index
    %c0_6 = arith.constant 0 : index
    %c0_7 = arith.constant 0 : index
    %8 = vector.load %arg4[%c0_5, %c0_6, %c0_7] : memref<1x32x96xbf16, #tpu.memory_space<vmem>>, vector<1x32x96xbf16>
    %9 = vector.shape_cast %8 : vector<1x32x96xbf16> to vector<32x96xbf16>
    %cst = arith.constant dense<0.000000e+00> : vector<8x96xf32>
    %10 = tpu.matmul %7, %9, %cst {dimension_numbers = #tpu.dot_dimension_numbers<[1], [0], [0], [1], [0, 0, 1, 1], [], []>} : vector<8x32xbf16>, vector<32x96xbf16>, vector<8x96xf32> -> vector<8x96xf32>
    %11 = vector.extract_strided_slice %10 {offsets = [0, 0], sizes = [8, 32], strides = [1, 1]} : vector<8x96xf32> to vector<8x32xf32>
    %cst_8 = arith.constant 0.353553385 : f32
    %12 = vector.broadcast %cst_8 : f32 to vector<8x32xf32>
    %13 = arith.mulf %11, %12 : vector<8x32xf32>
    %14 = vector.shape_cast %13 : vector<8x32xf32> to vector<8x4x8xf32>
    %15 = arith.truncf %14 : vector<8x4x8xf32> to vector<8x4x8xbf16>
    %16 = vector.extract_strided_slice %10 {offsets = [0, 32], sizes = [8, 32], strides = [1, 1]} : vector<8x96xf32> to vector<8x32xf32>
    %17 = vector.shape_cast %16 : vector<8x32xf32> to vector<8x4x8xf32>
    %18 = arith.truncf %17 : vector<8x4x8xf32> to vector<8x4x8xbf16>
    %19 = vector.extract_strided_slice %10 {offsets = [0, 64], sizes = [8, 32], strides = [1, 1]} : vector<8x96xf32> to vector<8x32xf32>
    %20 = vector.shape_cast %19 : vector<8x32xf32> to vector<8x4x8xf32>
    %21 = arith.truncf %20 : vector<8x4x8xf32> to vector<8x4x8xbf16>
    "tpu.trace_start"() <{level = 10 : i32, message = "qhd,khd->hqk"}> : () -> ()
    %cst_9 = arith.constant dense<0.000000e+00> : vector<4x8x8xf32>
    %22 = tpu.matmul %15, %18, %cst_9 {dimension_numbers = #tpu.dot_dimension_numbers<[2], [2], [0], [0], [0, 1, 0, 0, 1, 0], [1], [1]>} : vector<8x4x8xbf16>, vector<8x4x8xbf16>, vector<4x8x8xf32> -> vector<4x8x8xf32>
    "tpu.trace_stop"() : () -> ()
    %23 = vector.shape_cast %6 : vector<8x8xf32> to vector<1x8x8xf32>
    %24 = vector.broadcast %23 : vector<1x8x8xf32> to vector<4x8x8xf32>
    %25 = arith.addf %22, %24 : vector<4x8x8xf32>
    %cst_10 = arith.constant dense<0xFF800000> : vector<4x8xf32>
    %26 = vector.multi_reduction <maximumf>, %25, %cst_10 [2] : vector<4x8x8xf32> to vector<4x8xf32>
    %27 = vector.shape_cast %26 : vector<4x8xf32> to vector<4x8x1xf32>
    %28 = vector.broadcast %27 : vector<4x8x1xf32> to vector<4x8x8xf32>
    %29 = arith.subf %25, %28 : vector<4x8x8xf32>
    %30 = math.exp %29 : vector<4x8x8xf32>
    %cst_11 = arith.constant dense<0.000000e+00> : vector<4x8xf32>
    %31 = vector.multi_reduction <add>, %30, %cst_11 [2] : vector<4x8x8xf32> to vector<4x8xf32>
    %32 = vector.shape_cast %31 : vector<4x8xf32> to vector<4x8x1xf32>
    %33 = vector.broadcast %32 : vector<4x8x1xf32> to vector<4x8x8xf32>
    %34 = arith.divf %30, %33 : vector<4x8x8xf32>
    %35 = arith.truncf %34 : vector<4x8x8xf32> to vector<4x8x8xbf16>
    "tpu.trace_start"() <{level = 10 : i32, message = "hqk,khd->qhd"}> : () -> ()
    %cst_12 = arith.constant dense<0.000000e+00> : vector<4x8x8xf32>
    %36 = tpu.matmul %21, %35, %cst_12 {dimension_numbers = #tpu.dot_dimension_numbers<[0], [2], [2], [1], [0, 1, 0, 2, 1, 1], [1], [0]>} : vector<8x4x8xbf16>, vector<4x8x8xbf16>, vector<4x8x8xf32> -> vector<4x8x8xf32>
    %37 = tpu.transpose %36, [2, 0, 1] : vector<4x8x8xf32> -> vector<8x4x8xf32>
    "tpu.trace_stop"() : () -> ()
    %38 = vector.shape_cast %37 : vector<8x4x8xf32> to vector<8x32xf32>
    %39 = arith.truncf %38 : vector<8x32xf32> to vector<8x32xbf16>
    %c0_13 = arith.constant 0 : index
    %c0_14 = arith.constant 0 : index
    %c0_15 = arith.constant 0 : index
    %40 = vector.load %arg5[%c0_13, %c0_14, %c0_15] : memref<1x32x32xbf16, #tpu.memory_space<vmem>>, vector<1x32x32xbf16>
    %41 = vector.shape_cast %40 : vector<1x32x32xbf16> to vector<32x32xbf16>
    %cst_16 = arith.constant dense<0.000000e+00> : vector<8x32xf32>
    %42 = tpu.matmul %39, %41, %cst_16 {dimension_numbers = #tpu.dot_dimension_numbers<[1], [0], [0], [1], [0, 0, 1, 1], [], []>} : vector<8x32xbf16>, vector<32x32xbf16>, vector<8x32xf32> -> vector<8x32xf32>
    %43 = arith.addf %42, %3 : vector<8x32xf32>
    %c0_17 = arith.constant 0 : index
    %c0_18 = arith.constant 0 : index
    %c0_19 = arith.constant 0 : index
    %44 = vector.load %arg6[%c0_17, %c0_18, %c0_19] : memref<1x1x32xf32, #tpu.memory_space<vmem>>, vector<1x1x32xf32>
    %45 = vector.shape_cast %44 : vector<1x1x32xf32> to vector<1x32xf32>
    %c0_20 = arith.constant 0 : index
    %c0_21 = arith.constant 0 : index
    %c0_22 = arith.constant 0 : index
    %46 = vector.load %arg7[%c0_20, %c0_21, %c0_22] : memref<1x1x32xf32, #tpu.memory_space<vmem>>, vector<1x1x32xf32>
    %47 = vector.shape_cast %46 : vector<1x1x32xf32> to vector<1x32xf32>
    %cst_23 = arith.constant dense<0.000000e+00> : vector<8xf32>
    %48 = vector.multi_reduction <add>, %43, %cst_23 [1] : vector<8x32xf32> to vector<8xf32>
    %49 = vector.shape_cast %48 : vector<8xf32> to vector<8x1xf32>
    %cst_24 = arith.constant 3.200000e+01 : f32
    %50 = vector.broadcast %cst_24 : f32 to vector<8x1xf32>
    %51 = arith.divf %49, %50 : vector<8x1xf32>
    %52 = vector.broadcast %51 : vector<8x1xf32> to vector<8x32xf32>
    %53 = arith.subf %43, %52 : vector<8x32xf32>
    %54 = arith.mulf %53, %53 : vector<8x32xf32>
    %cst_25 = arith.constant dense<0.000000e+00> : vector<8xf32>
    %55 = vector.multi_reduction <add>, %54, %cst_25 [1] : vector<8x32xf32> to vector<8xf32>
    %56 = vector.shape_cast %55 : vector<8xf32> to vector<8x1xf32>
    %cst_26 = arith.constant 3.200000e+01 : f32
    %57 = vector.broadcast %cst_26 : f32 to vector<8x1xf32>
    %58 = arith.divf %56, %57 : vector<8x1xf32>
    %59 = vector.broadcast %51 : vector<8x1xf32> to vector<8x32xf32>
    %60 = arith.subf %43, %59 : vector<8x32xf32>
    %cst_27 = arith.constant 9.99999997E-7 : f32
    %61 = vector.broadcast %cst_27 : f32 to vector<8x1xf32>
    %62 = arith.addf %58, %61 : vector<8x1xf32>
    %63 = math.rsqrt %62 : vector<8x1xf32>
    %64 = vector.broadcast %63 : vector<8x1xf32> to vector<8x32xf32>
    %65 = arith.mulf %60, %64 : vector<8x32xf32>
    %66 = vector.broadcast %45 : vector<1x32xf32> to vector<8x32xf32>
    %67 = arith.mulf %65, %66 : vector<8x32xf32>
    %68 = vector.broadcast %47 : vector<1x32xf32> to vector<8x32xf32>
    %69 = arith.addf %67, %68 : vector<8x32xf32>
    %70 = arith.truncf %69 : vector<8x32xf32> to vector<8x32xbf16>
    %c0_28 = arith.constant 0 : index
    %c0_29 = arith.constant 0 : index
    %c0_30 = arith.constant 0 : index
    %71 = vector.load %arg8[%c0_28, %c0_29, %c0_30] : memref<1x32x64xbf16, #tpu.memory_space<vmem>>, vector<1x32x64xbf16>
    %72 = vector.shape_cast %71 : vector<1x32x64xbf16> to vector<32x64xbf16>
    %cst_31 = arith.constant dense<0.000000e+00> : vector<8x64xf32>
    %73 = tpu.matmul %70, %72, %cst_31 {dimension_numbers = #tpu.dot_dimension_numbers<[1], [0], [0], [1], [0, 0, 1, 1], [], []>} : vector<8x32xbf16>, vector<32x64xbf16>, vector<8x64xf32> -> vector<8x64xf32>
    %c0_32 = arith.constant 0 : index
    %c0_33 = arith.constant 0 : index
    %c0_34 = arith.constant 0 : index
    %74 = vector.load %arg9[%c0_32, %c0_33, %c0_34] : memref<1x1x64xf32, #tpu.memory_space<vmem>>, vector<1x1x64xf32>
    %75 = vector.shape_cast %74 : vector<1x1x64xf32> to vector<1x64xf32>
    %76 = vector.broadcast %75 : vector<1x64xf32> to vector<8x64xf32>
    %77 = arith.addf %73, %76 : vector<8x64xf32>
    %cst_35 = arith.constant 0.000000e+00 : f32
    %78 = vector.broadcast %cst_35 : f32 to vector<8x64xf32>
    %79 = arith.maximumf %77, %78 : vector<8x64xf32>
    %80 = arith.truncf %79 : vector<8x64xf32> to vector<8x64xbf16>
    %c0_36 = arith.constant 0 : index
    %c0_37 = arith.constant 0 : index
    %c0_38 = arith.constant 0 : index
    %81 = vector.load %arg10[%c0_36, %c0_37, %c0_38] : memref<1x64x32xbf16, #tpu.memory_space<vmem>>, vector<1x64x32xbf16>
    %82 = vector.shape_cast %81 : vector<1x64x32xbf16> to vector<64x32xbf16>
    %cst_39 = arith.constant dense<0.000000e+00> : vector<8x32xf32>
    %83 = tpu.matmul %80, %82, %cst_39 {dimension_numbers = #tpu.dot_dimension_numbers<[1], [0], [0], [1], [0, 0, 1, 1], [], []>} : vector<8x64xbf16>, vector<64x32xbf16>, vector<8x32xf32> -> vector<8x32xf32>
    %c0_40 = arith.constant 0 : index
    %c0_41 = arith.constant 0 : index
    %c0_42 = arith.constant 0 : index
    %84 = vector.load %arg11[%c0_40, %c0_41, %c0_42] : memref<1x1x32xf32, #tpu.memory_space<vmem>>, vector<1x1x32xf32>
    %85 = vector.shape_cast %84 : vector<1x1x32xf32> to vector<1x32xf32>
    %86 = vector.broadcast %85 : vector<1x32xf32> to vector<8x32xf32>
    %87 = arith.addf %83, %86 : vector<8x32xf32>
    %88 = arith.addf %87, %69 : vector<8x32xf32>
    %c0_43 = arith.constant 0 : index
    %c0_44 = arith.constant 0 : index
    %c0_45 = arith.constant 0 : index
    %89 = vector.load %arg12[%c0_43, %c0_44, %c0_45] : memref<1x1x32xf32, #tpu.memory_space<vmem>>, vector<1x1x32xf32>
    %90 = vector.shape_cast %89 : vector<1x1x32xf32> to vector<1x32xf32>
    %c0_46 = arith.constant 0 : index
    %c0_47 = arith.constant 0 : index
    %c0_48 = arith.constant 0 : index
    %91 = vector.load %arg13[%c0_46, %c0_47, %c0_48] : memref<1x1x32xf32, #tpu.memory_space<vmem>>, vector<1x1x32xf32>
    %92 = vector.shape_cast %91 : vector<1x1x32xf32> to vector<1x32xf32>
    %cst_49 = arith.constant dense<0.000000e+00> : vector<8xf32>
    %93 = vector.multi_reduction <add>, %88, %cst_49 [1] : vector<8x32xf32> to vector<8xf32>
    %94 = vector.shape_cast %93 : vector<8xf32> to vector<8x1xf32>
    %cst_50 = arith.constant 3.200000e+01 : f32
    %95 = vector.broadcast %cst_50 : f32 to vector<8x1xf32>
    %96 = arith.divf %94, %95 : vector<8x1xf32>
    %97 = vector.broadcast %96 : vector<8x1xf32> to vector<8x32xf32>
    %98 = arith.subf %88, %97 : vector<8x32xf32>
    %99 = arith.mulf %98, %98 : vector<8x32xf32>
    %cst_51 = arith.constant dense<0.000000e+00> : vector<8xf32>
    %100 = vector.multi_reduction <add>, %99, %cst_51 [1] : vector<8x32xf32> to vector<8xf32>
    %101 = vector.shape_cast %100 : vector<8xf32> to vector<8x1xf32>
    %cst_52 = arith.constant 3.200000e+01 : f32
    %102 = vector.broadcast %cst_52 : f32 to vector<8x1xf32>
    %103 = arith.divf %101, %102 : vector<8x1xf32>
    %104 = vector.broadcast %96 : vector<8x1xf32> to vector<8x32xf32>
    %105 = arith.subf %88, %104 : vector<8x32xf32>
    %cst_53 = arith.constant 9.99999997E-7 : f32
    %106 = vector.broadcast %cst_53 : f32 to vector<8x1xf32>
    %107 = arith.addf %103, %106 : vector<8x1xf32>
    %108 = math.rsqrt %107 : vector<8x1xf32>
    %109 = vector.broadcast %108 : vector<8x1xf32> to vector<8x32xf32>
    %110 = arith.mulf %105, %109 : vector<8x32xf32>
    %111 = vector.broadcast %90 : vector<1x32xf32> to vector<8x32xf32>
    %112 = arith.mulf %110, %111 : vector<8x32xf32>
    %113 = vector.broadcast %92 : vector<1x32xf32> to vector<8x32xf32>
    %114 = arith.addf %112, %113 : vector<8x32xf32>
    %c0_54 = arith.constant 0 : index
    %c0_55 = arith.constant 0 : index
    %115 = vector.load %arg15[%c0_54, %c0_55] : memref<8x32xf32, #tpu.memory_space<vmem>>, vector<8x32xf32>
    tpu.vector_store %arg15[%c0_54, %c0_55], %114 {strides = array<i32>} : memref<8x32xf32, #tpu.memory_space<vmem>>, vector<8x32xf32>,
    %c1_i32 = arith.constant 1 : i32
    %116 = arith.cmpi eq, %arg1, %c1_i32 : i32
    %117 = arith.extui %116 : i1 to i32
    %c0_i32_56 = arith.constant 0 : i32
    %118 = arith.cmpi ne, %117, %c0_i32_56 : i32
    scf.if %118 {
      %c0_57 = arith.constant 0 : index
      %c0_58 = arith.constant 0 : index
      %c0_59 = arith.constant 0 : index
      %119 = vector.load %arg14[%c0_57, %c0_58, %c0_59] : memref<1x8x32xf32, #tpu.memory_space<vmem>>, vector<1x8x32xf32>
      %120 = vector.shape_cast %119 : vector<1x8x32xf32> to vector<8x32xf32>
      %121 = vector.shape_cast %114 : vector<8x32xf32> to vector<1x8x32xf32>
      tpu.vector_store %arg14[%c0_57, %c0_58, %c0_59], %121 {strides = array<i32>} : memref<1x8x32xf32, #tpu.memory_space<vmem>>, vector<1x8x32xf32>,
    } else {
    }
    return
  }
  func.func @transform_0(%arg0: i32, %arg1: i32) -> (i32, i32, i32) {
    %c0_i32 = arith.constant 0 : i32
    %c0_i32_0 = arith.constant 0 : i32
    %c0_i32_1 = arith.constant 0 : i32
    return %arg0, %c0_i32, %c0_i32_0 : i32, i32, i32
  }
  func.func @transform_1(%arg0: i32, %arg1: i32) -> (i32, i32, i32) {
    %c0_i32 = arith.constant 0 : i32
    %c0_i32_0 = arith.constant 0 : i32
    %c0_i32_1 = arith.constant 0 : i32
    return %arg0, %c0_i32, %c0_i32_0 : i32, i32, i32
  }
  func.func @transform_2(%arg0: i32, %arg1: i32) -> (i32, i32, i32) {
    %c0_i32 = arith.constant 0 : i32
    %c0_i32_0 = arith.constant 0 : i32
    %c0_i32_1 = arith.constant 0 : i32
    return %arg1, %c0_i32, %c0_i32_0 : i32, i32, i32
  }
  func.func @transform_3(%arg0: i32, %arg1: i32) -> (i32, i32, i32) {
    %c0_i32 = arith.constant 0 : i32
    %c0_i32_0 = arith.constant 0 : i32
    %c0_i32_1 = arith.constant 0 : i32
    return %arg1, %c0_i32, %c0_i32_0 : i32, i32, i32
  }
  func.func @transform_4(%arg0: i32, %arg1: i32) -> (i32, i32, i32) {
    %c0_i32 = arith.constant 0 : i32
    %c0_i32_0 = arith.constant 0 : i32
    %c0_i32_1 = arith.constant 0 : i32
    return %arg1, %c0_i32, %c0_i32_0 : i32, i32, i32
  }
  func.func @transform_5(%arg0: i32, %arg1: i32) -> (i32, i32, i32) {
    %c0_i32 = arith.constant 0 : i32
    %c0_i32_0 = arith.constant 0 : i32
    %c0_i32_1 = arith.constant 0 : i32
    return %arg1, %c0_i32, %c0_i32_0 : i32, i32, i32
  }
  func.func @transform_6(%arg0: i32, %arg1: i32) -> (i32, i32, i32) {
    %c0_i32 = arith.constant 0 : i32
    %c0_i32_0 = arith.constant 0 : i32
    %c0_i32_1 = arith.constant 0 : i32
    return %arg1, %c0_i32, %c0_i32_0 : i32, i32, i32
  }
  func.func @transform_7(%arg0: i32, %arg1: i32) -> (i32, i32, i32) {
    %c0_i32 = arith.constant 0 : i32
    %c0_i32_0 = arith.constant 0 : i32
    %c0_i32_1 = arith.constant 0 : i32
    return %arg1, %c0_i32, %c0_i32_0 : i32, i32, i32
  }
  func.func @transform_8(%arg0: i32, %arg1: i32) -> (i32, i32, i32) {
    %c0_i32 = arith.constant 0 : i32
    %c0_i32_0 = arith.constant 0 : i32
    %c0_i32_1 = arith.constant 0 : i32
    return %arg1, %c0_i32, %c0_i32_0 : i32, i32, i32
  }
  func.func @transform_9(%arg0: i32, %arg1: i32) -> (i32, i32, i32) {
    %c0_i32 = arith.constant 0 : i32
    %c0_i32_0 = arith.constant 0 : i32
    %c0_i32_1 = arith.constant 0 : i32
    return %arg1, %c0_i32, %c0_i32_0 : i32, i32, i32
  }
  func.func @transform_10(%arg0: i32, %arg1: i32) -> (i32, i32, i32) {
    %c0_i32 = arith.constant 0 : i32
    %c0_i32_0 = arith.constant 0 : i32
    %c0_i32_1 = arith.constant 0 : i32
    return %arg1, %c0_i32, %c0_i32_0 : i32, i32, i32
  }
  func.func @transform_11(%arg0: i32, %arg1: i32) -> (i32, i32, i32) {
    %c0_i32 = arith.constant 0 : i32
    %c0_i32_0 = arith.constant 0 : i32
    %c0_i32_1 = arith.constant 0 : i32
    return %arg1, %c0_i32, %c0_i32_0 : i32, i32, i32
  }
  func.func @transform_12(%arg0: i32, %arg1: i32) -> (i32, i32, i32) {
    %c0_i32 = arith.constant 0 : i32
    %c0_i32_0 = arith.constant 0 : i32
    %c0_i32_1 = arith.constant 0 : i32
    return %arg0, %c0_i32, %c0_i32_0 : i32, i32, i32
  }
}

</mosaic_0001>

<llo_original>
// kernel: tpu_custom_call.1
$region0: #{tpu_custom_call.1}
  #allocation0 [shape = 'u32[]', space=smem, size = 0x4, offset = 0x4, fixed_abs, tag = 'smem constant byte address 0x4 - core index']
  #allocation1 [shape = 'u32[144,128]{1,0:T(1,128)}', space=vmem, size = 0x12000, scoped, tag = 'internal scratch']
  #allocation2 [shape = 'f32[8,32]{1,0:T(8,128)}', space=vmem, size = 0x1000, scoped, tag = 'scratch operand']
  %s0 = inlined_call_operand.hbm [shape: f32[2,8,32], index: 0, kind: input, shape index: {}]
  %s1 = inlined_call_operand.hbm [shape: bf16[2,8,8], index: 1, kind: input, shape index: {}]
  %s2 = inlined_call_operand.vmem [shape: bf16[2,32,96], index: 2, kind: input, shape index: {}]
  %s3 = inlined_call_operand.vmem [shape: bf16[2,32,32], index: 3, kind: input, shape index: {}]
  %s4 = inlined_call_operand.vmem [shape: f32[2,1,32], index: 4, kind: input, shape index: {}]
  %s5 = inlined_call_operand.vmem [shape: f32[2,1,32], index: 5, kind: input, shape index: {}]
  %s6 = inlined_call_operand.vmem [shape: bf16[2,32,64], index: 6, kind: input, shape index: {}]
  %s7 = inlined_call_operand.vmem [shape: f32[2,1,64], index: 7, kind: input, shape index: {}]
  %s8 = inlined_call_operand.vmem [shape: bf16[2,64,32], index: 8, kind: input, shape index: {}]
  %s9 = inlined_call_operand.vmem [shape: f32[2,1,32], index: 9, kind: input, shape index: {}]
  %s10 = inlined_call_operand.vmem [shape: f32[2,1,32], index: 10, kind: input, shape index: {}]
  %s11 = inlined_call_operand.vmem [shape: f32[2,1,32], index: 11, kind: input, shape index: {}]
  %s12 = inlined_call_operand.hbm [shape: f32[2,8,32], index: 12, kind: output, shape index: {}]
  %s13 = sld [smem:[#allocation0]]
  $region97: #{tpu_custom_call.1} parent=0
    _
  %s15 = ssub.s32 1, %s13
  %s16 = scalar_select 0, %s15, %s13
  $region1: #{tpu_custom_call.1} parent=0
    #allocation3 [shape = 'u8[8192]{0}', space=vmem, size = 0x2000, scoped, tag = 'input window, operand 0']
    #allocation4 [shape = 's32[2]{0}', space=sflag, size = 0x8, scoped, tag = 'scoped memory for tpu_custom_call.1']
    #allocation5 [shape = 's32[2]{0}', space=sflag, size = 0x8, scoped, tag = 'scoped memory for tpu_custom_call.1']
    #allocation6 [shape = 'u8[4096]{0}', space=vmem, size = 0x1000, scoped, tag = 'input window, operand 1']
    #allocation7 [shape = 's32[2]{0}', space=sflag, size = 0x8, scoped, tag = 'scoped memory for tpu_custom_call.1']
    #allocation8 [shape = 'u8[8192]{0}', space=vmem, size = 0x2000, scoped, tag = 'output window, operand 0']
    %17 = vsyncpa [#allocation4], 0
    %s18 = scalar_lea.sflag [#allocation4], 1
    %19 = vsyncpa %s18, 0
    %20 = vsyncpa [#allocation7], 0
    %s21 = scalar_lea.sflag [#allocation7], 1
    %22 = vsyncpa %s21, 0
    %23 = vsyncpa [#allocation5], 0
    %s24 = scalar_lea.sflag [#allocation5], 1
    %25 = vsyncpa %s24, 0
    loop: start=0, step=1, limit=6
    $region2: #{tpu_custom_call.1} parent=1 // loop_pre_header
      _
    $region3: #{tpu_custom_call.1} parent=1 // loop_header
      %s27 = sphi 0, %s31
      %p28 = scmp.ge.s32.totalorder %s27, 6
      %s34 = sphi 0, %s46
      %s35 = sphi 0, %s42
      %s36 = sphi 0, %s34
      %s37 = sphi 0, %s35
      %s38 = sphi 0, %s36
      %s39 = sphi 0, %s37
      %s49 = sphi 0, %s51
      %s52 = sphi 0, %s49
      %s53 = sphi 0, %s52
      %s69 = sphi 0, %s53
      %s75 = sphi 0, %s77
      %s78 = sphi 0, %s75
      %s79 = sphi 0, %s78
      %s95 = sphi 0, %s79
      %s101 = sphi 0, %s103
      %s104 = sphi 0, %s101
      %s105 = sphi 0, %s104
      %s121 = sphi 0, %s105
      %s127 = sphi 0, %s129
      %s130 = sphi 0, %s127
      %s131 = sphi 0, %s130
      %s147 = sphi 0, %s131
      %s153 = sphi 0, %s155
      %s156 = sphi 0, %s153
      %s157 = sphi 0, %s156
      %s173 = sphi 0, %s157
      %s179 = sphi 0, %s181
      %s182 = sphi 0, %s179
      %s183 = sphi 0, %s182
      %s199 = sphi 0, %s183
      %s205 = sphi 0, %s207
      %s208 = sphi 0, %s205
      %s209 = sphi 0, %s208
      %s225 = sphi 0, %s209
      %s231 = sphi 0, %s233
      %s234 = sphi 0, %s231
      %s235 = sphi 0, %s234
      %s251 = sphi 0, %s235
      %s257 = sphi 0, %s259
      %s260 = sphi 0, %s257
      %s261 = sphi 0, %s260
      %s277 = sphi 0, %s261
      %s283 = sphi 0, %s285
      %s286 = sphi 0, %s283
      %s287 = sphi 0, %s286
      %s303 = sphi 0, %s287
      %s309 = sphi 0, %s311
      %s312 = sphi 0, %s309
      %s313 = sphi 0, %s312
      %s329 = sphi 0, %s313
      %s335 = sphi 0, %s337
      %s338 = sphi 0, %s335
      %s339 = sphi 0, %s338
      %s355 = sphi 0, %s339
      %s361 = sphi 0, %s363
      %s364 = sphi 0, %s361
      %s365 = sphi 0, %s364
      %s381 = sphi 0, %s365
    $region4: #{tpu_custom_call.1} parent=1 // loop_header_branch
      %30 = sbr.rel (%p28) target = $region8
    $region5: #{tpu_custom_call.1} parent=1 // loop_body
      %s32 = ssub.s32 %s27, 1
      %s33 = ssub.s32 %s27, 2
      %s40 = sadd.s32 1, %s35
      %p41 = scmp.ge.s32.totalorder %s40, 2
      %s42 = scalar_select %p41, 0, %s40
      %s43 = sadd.s32 1, %s34
      %s44 = scalar_select %p41, %s43, %s34
      %p45 = scmp.ge.s32.totalorder %s44, 2
      %s46 = scalar_select %p45, 0, %s44
      %s47 = ssub.s32 %s34, %s46
      %p48 = scmp.eq.s32.totalorder %s47, 0
      %s50 = sadd.s32 %s49, 1
      %s51 = scalar_select %p48, %s49, %s50
      %p54 = pneg %p48
      %p55 = scmp.eq.s32.totalorder %s27, 3
      %p56 = por %p54, %p55
      %p57 = scmp.ne.s32.totalorder %s49, %s52
      %p58 = scmp.eq.s32.totalorder %s27, 0
      %p59 = por %p57, %p58
      %p60 = scmp.ne.s32.totalorder %s49, %s52
      %p61 = scmp.eq.s32.totalorder %s32, 3
      %p62 = por %p60, %p61
      %p63 = scmp.ne.s32.totalorder %s52, %s53
      %p64 = scmp.eq.s32.totalorder %s32, 0
      %p65 = por %p63, %p64
      %p66 = scmp.ne.s32.totalorder %s52, %s53
      %p67 = scmp.eq.s32.totalorder %s33, 3
      %p68 = por %p66, %p67
      %p70 = scmp.ne.s32.totalorder %s53, %s69
      %p71 = scmp.eq.s32.totalorder %s33, 0
      %p72 = por %p70, %p71
      %s73 = ssub.s32 %s34, %s46
      %p74 = scmp.eq.s32.totalorder %s73, 0
      %s76 = sadd.s32 %s75, 1
      %s77 = scalar_select %p74, %s75, %s76
      %p80 = pneg %p74
      %p81 = scmp.eq.s32.totalorder %s27, 3
      %p82 = por %p80, %p81
      %p83 = scmp.ne.s32.totalorder %s75, %s78
      %p84 = scmp.eq.s32.totalorder %s27, 0
      %p85 = por %p83, %p84
      %p86 = scmp.ne.s32.totalorder %s75, %s78
      %p87 = scmp.eq.s32.totalorder %s32, 3
      %p88 = por %p86, %p87
      %p89 = scmp.ne.s32.totalorder %s78, %s79
      %p90 = scmp.eq.s32.totalorder %s32, 0
      %p91 = por %p89, %p90
      %p92 = scmp.ne.s32.totalorder %s78, %s79
      %p93 = scmp.eq.s32.totalorder %s33, 3
      %p94 = por %p92, %p93
      %p96 = scmp.ne.s32.totalorder %s79, %s95
      %p97 = scmp.eq.s32.totalorder %s33, 0
      %p98 = por %p96, %p97
      %s99 = ssub.s32 %s35, %s42
      %p100 = scmp.eq.s32.totalorder %s99, 0
      %s102 = sadd.s32 %s101, 1
      %s103 = scalar_select %p100, %s101, %s102
      %p106 = pneg %p100
      %p107 = scmp.eq.s32.totalorder %s27, 3
      %p108 = por %p106, %p107
      %p109 = scmp.ne.s32.totalorder %s101, %s104
      %p110 = scmp.eq.s32.totalorder %s27, 0
      %p111 = por %p109, %p110
      %p112 = scmp.ne.s32.totalorder %s101, %s104
      %p113 = scmp.eq.s32.totalorder %s32, 3
      %p114 = por %p112, %p113
      %p115 = scmp.ne.s32.totalorder %s104, %s105
      %p116 = scmp.eq.s32.totalorder %s32, 0
      %p117 = por %p115, %p116
      %p118 = scmp.ne.s32.totalorder %s104, %s105
      %p119 = scmp.eq.s32.totalorder %s33, 3
      %p120 = por %p118, %p119
      %p122 = scmp.ne.s32.totalorder %s105, %s121
      %p123 = scmp.eq.s32.totalorder %s33, 0
      %p124 = por %p122, %p123
      %s125 = ssub.s32 %s35, %s42
      %p126 = scmp.eq.s32.totalorder %s125, 0
      %s128 = sadd.s32 %s127, 1
      %s129 = scalar_select %p126, %s127, %s128
      %p132 = pneg %p126
      %p133 = scmp.eq.s32.totalorder %s27, 3
      %p134 = por %p132, %p133
      %p135 = scmp.ne.s32.totalorder %s127, %s130
      %p136 = scmp.eq.s32.totalorder %s27, 0
      %p137 = por %p135, %p136
      %p138 = scmp.ne.s32.totalorder %s127, %s130
      %p139 = scmp.eq.s32.totalorder %s32, 3
      %p140 = por %p138, %p139
      %p141 = scmp.ne.s32.totalorder %s130, %s131
      %p142 = scmp.eq.s32.totalorder %s32, 0
      %p143 = por %p141, %p142
      %p144 = scmp.ne.s32.totalorder %s130, %s131
      %p145 = scmp.eq.s32.totalorder %s33, 3
      %p146 = por %p144, %p145
      %p148 = scmp.ne.s32.totalorder %s131, %s147
      %p149 = scmp.eq.s32.totalorder %s33, 0
      %p150 = por %p148, %p149
      %s151 = ssub.s32 %s35, %s42
      %p152 = scmp.eq.s32.totalorder %s151, 0
      %s154 = sadd.s32 %s153, 1
      %s155 = scalar_select %p152, %s153, %s154
      %p158 = pneg %p152
      %p159 = scmp.eq.s32.totalorder %s27, 3
      %p160 = por %p158, %p159
      %p161 = scmp.ne.s32.totalorder %s153, %s156
      %p162 = scmp.eq.s32.totalorder %s27, 0
      %p163 = por %p161, %p162
      %p164 = scmp.ne.s32.totalorder %s153, %s156
      %p165 = scmp.eq.s32.totalorder %s32, 3
      %p166 = por %p164, %p165
      %p167 = scmp.ne.s32.totalorder %s156, %s157
      %p168 = scmp.eq.s32.totalorder %s32, 0
      %p169 = por %p167, %p168
      %p170 = scmp.ne.s32.totalorder %s156, %s157
      %p171 = scmp.eq.s32.totalorder %s33, 3
      %p172 = por %p170, %p171
      %p174 = scmp.ne.s32.totalorder %s157, %s173
      %p175 = scmp.eq.s32.totalorder %s33, 0
      %p176 = por %p174, %p175
      %s177 = ssub.s32 %s35, %s42
      %p178 = scmp.eq.s32.totalorder %s177, 0
      %s180 = sadd.s32 %s179, 1
      %s181 = scalar_select %p178, %s179, %s180
      %p184 = pneg %p178
      %p185 = scmp.eq.s32.totalorder %s27, 3
      %p186 = por %p184, %p185
      %p187 = scmp.ne.s32.totalorder %s179, %s182
      %p188 = scmp.eq.s32.totalorder %s27, 0
      %p189 = por %p187, %p188
      %p190 = scmp.ne.s32.totalorder %s179, %s182
      %p191 = scmp.eq.s32.totalorder %s32, 3
      %p192 = por %p190, %p191
      %p193 = scmp.ne.s32.totalorder %s182, %s183
      %p194 = scmp.eq.s32.totalorder %s32, 0
      %p195 = por %p193, %p194
      %p196 = scmp.ne.s32.totalorder %s182, %s183
      %p197 = scmp.eq.s32.totalorder %s33, 3
      %p198 = por %p196, %p197
      %p200 = scmp.ne.s32.totalorder %s183, %s199
      %p201 = scmp.eq.s32.totalorder %s33, 0
      %p202 = por %p200, %p201
      %s203 = ssub.s32 %s35, %s42
      %p204 = scmp.eq.s32.totalorder %s203, 0
      %s206 = sadd.s32 %s205, 1
      %s207 = scalar_select %p204, %s205, %s206
      %p210 = pneg %p204
      %p211 = scmp.eq.s32.totalorder %s27, 3
      %p212 = por %p210, %p211
      %p213 = scmp.ne.s32.totalorder %s205, %s208
      %p214 = scmp.eq.s32.totalorder %s27, 0
      %p215 = por %p213, %p214
      %p216 = scmp.ne.s32.totalorder %s205, %s208
      %p217 = scmp.eq.s32.totalorder %s32, 3
      %p218 = por %p216, %p217
      %p219 = scmp.ne.s32.totalorder %s208, %s209
      %p220 = scmp.eq.s32.totalorder %s32, 0
      %p221 = por %p219, %p220
      %p222 = scmp.ne.s32.totalorder %s208, %s209
      %p223 = scmp.eq.s32.totalorder %s33, 3
      %p224 = por %p222, %p223
      %p226 = scmp.ne.s32.totalorder %s209, %s225
      %p227 = scmp.eq.s32.totalorder %s33, 0
      %p228 = por %p226, %p227
      %s229 = ssub.s32 %s35, %s42
      %p230 = scmp.eq.s32.totalorder %s229, 0
      %s232 = sadd.s32 %s231, 1
      %s233 = scalar_select %p230, %s231, %s232
      %p236 = pneg %p230
      %p237 = scmp.eq.s32.totalorder %s27, 3
      %p238 = por %p236, %p237
      %p239 = scmp.ne.s32.totalorder %s231, %s234
      %p240 = scmp.eq.s32.totalorder %s27, 0
      %p241 = por %p239, %p240
      %p242 = scmp.ne.s32.totalorder %s231, %s234
      %p243 = scmp.eq.s32.totalorder %s32, 3
      %p244 = por %p242, %p243
      %p245 = scmp.ne.s32.totalorder %s234, %s235
      %p246 = scmp.eq.s32.totalorder %s32, 0
      %p247 = por %p245, %p246
      %p248 = scmp.ne.s32.totalorder %s234, %s235
      %p249 = scmp.eq.s32.totalorder %s33, 3
      %p250 = por %p248, %p249
      %p252 = scmp.ne.s32.totalorder %s235, %s251
      %p253 = scmp.eq.s32.totalorder %s33, 0
      %p254 = por %p252, %p253
      %s255 = ssub.s32 %s35, %s42
      %p256 = scmp.eq.s32.totalorder %s255, 0
      %s258 = sadd.s32 %s257, 1
      %s259 = scalar_select %p256, %s257, %s258
      %p262 = pneg %p256
      %p263 = scmp.eq.s32.totalorder %s27, 3
      %p264 = por %p262, %p263
      %p265 = scmp.ne.s32.totalorder %s257, %s260
      %p266 = scmp.eq.s32.totalorder %s27, 0
      %p267 = por %p265, %p266
      %p268 = scmp.ne.s32.totalorder %s257, %s260
      %p269 = scmp.eq.s32.totalorder %s32, 3
      %p270 = por %p268, %p269
      %p271 = scmp.ne.s32.totalorder %s260, %s261
      %p272 = scmp.eq.s32.totalorder %s32, 0
      %p273 = por %p271, %p272
      %p274 = scmp.ne.s32.totalorder %s260, %s261
      %p275 = scmp.eq.s32.totalorder %s33, 3
      %p276 = por %p274, %p275
      %p278 = scmp.ne.s32.totalorder %s261, %s277
      %p279 = scmp.eq.s32.totalorder %s33, 0
      %p280 = por %p278, %p279
      %s281 = ssub.s32 %s35, %s42
      %p282 = scmp.eq.s32.totalorder %s281, 0
      %s284 = sadd.s32 %s283, 1
      %s285 = scalar_select %p282, %s283, %s284
      %p288 = pneg %p282
      %p289 = scmp.eq.s32.totalorder %s27, 3
      %p290 = por %p288, %p289
      %p291 = scmp.ne.s32.totalorder %s283, %s286
      %p292 = scmp.eq.s32.totalorder %s27, 0
      %p293 = por %p291, %p292
      %p294 = scmp.ne.s32.totalorder %s283, %s286
      %p295 = scmp.eq.s32.totalorder %s32, 3
      %p296 = por %p294, %p295
      %p297 = scmp.ne.s32.totalorder %s286, %s287
      %p298 = scmp.eq.s32.totalorder %s32, 0
      %p299 = por %p297, %p298
      %p300 = scmp.ne.s32.totalorder %s286, %s287
      %p301 = scmp.eq.s32.totalorder %s33, 3
      %p302 = por %p300, %p301
      %p304 = scmp.ne.s32.totalorder %s287, %s303
      %p305 = scmp.eq.s32.totalorder %s33, 0
      %p306 = por %p304, %p305
      %s307 = ssub.s32 %s35, %s42
      %p308 = scmp.eq.s32.totalorder %s307, 0
      %s310 = sadd.s32 %s309, 1
      %s311 = scalar_select %p308, %s309, %s310
      %p314 = pneg %p308
      %p315 = scmp.eq.s32.totalorder %s27, 3
      %p316 = por %p314, %p315
      %p317 = scmp.ne.s32.totalorder %s309, %s312
      %p318 = scmp.eq.s32.totalorder %s27, 0
      %p319 = por %p317, %p318
      %p320 = scmp.ne.s32.totalorder %s309, %s312
      %p321 = scmp.eq.s32.totalorder %s32, 3
      %p322 = por %p320, %p321
      %p323 = scmp.ne.s32.totalorder %s312, %s313
      %p324 = scmp.eq.s32.totalorder %s32, 0
      %p325 = por %p323, %p324
      %p326 = scmp.ne.s32.totalorder %s312, %s313
      %p327 = scmp.eq.s32.totalorder %s33, 3
      %p328 = por %p326, %p327
      %p330 = scmp.ne.s32.totalorder %s313, %s329
      %p331 = scmp.eq.s32.totalorder %s33, 0
      %p332 = por %p330, %p331
      %s333 = ssub.s32 %s35, %s42
      %p334 = scmp.eq.s32.totalorder %s333, 0
      %s336 = sadd.s32 %s335, 1
      %s337 = scalar_select %p334, %s335, %s336
      %p340 = pneg %p334
      %p341 = scmp.eq.s32.totalorder %s27, 3
      %p342 = por %p340, %p341
      %p343 = scmp.ne.s32.totalorder %s335, %s338
      %p344 = scmp.eq.s32.totalorder %s27, 0
      %p345 = por %p343, %p344
      %p346 = scmp.ne.s32.totalorder %s335, %s338
      %p347 = scmp.eq.s32.totalorder %s32, 3
      %p348 = por %p346, %p347
      %p349 = scmp.ne.s32.totalorder %s338, %s339
      %p350 = scmp.eq.s32.totalorder %s32, 0
      %p351 = por %p349, %p350
      %p352 = scmp.ne.s32.totalorder %s338, %s339
      %p353 = scmp.eq.s32.totalorder %s33, 3
      %p354 = por %p352, %p353
      %p356 = scmp.ne.s32.totalorder %s339, %s355
      %p357 = scmp.eq.s32.totalorder %s33, 0
      %p358 = por %p356, %p357
      %s359 = ssub.s32 %s34, %s46
      %p360 = scmp.eq.s32.totalorder %s359, 0
      %s362 = sadd.s32 %s361, 1
      %s363 = scalar_select %p360, %s361, %s362
      %p366 = pneg %p360
      %p367 = scmp.eq.s32.totalorder %s27, 3
      %p368 = por %p366, %p367
      %p369 = scmp.ne.s32.totalorder %s361, %s364
      %p370 = scmp.eq.s32.totalorder %s27, 0
      %p371 = por %p369, %p370
      %p372 = scmp.ne.s32.totalorder %s361, %s364
      %p373 = scmp.eq.s32.totalorder %s32, 3
      %p374 = por %p372, %p373
      %p375 = scmp.ne.s32.totalorder %s364, %s365
      %p376 = scmp.eq.s32.totalorder %s32, 0
      %p377 = por %p375, %p376
      %p378 = scmp.ne.s32.totalorder %s364, %s365
      %p379 = scmp.eq.s32.totalorder %s33, 3
      %p380 = por %p378, %p379
      %p382 = scmp.ne.s32.totalorder %s365, %s381
      %p383 = scmp.eq.s32.totalorder %s33, 0
      %p384 = por %p382, %p383
      %p385 = scmp.le.s32.totalorder 1, %s27
      %p386 = scmp.lt.s32.totalorder %s27, 5
      %p387 = pnand %p385, %p386
      %p388 = pneg %p387
      // Predicated region
      $region9: #{tpu_custom_call.1} parent=5 // pred_check
        _
      $region10: #{tpu_custom_call.1} parent=5 // pred_check_branch
        %390 = sbr.rel (%p387) target = $region12
      $region11: #{tpu_custom_call.1} parent=5 // pred_region
        %s391 = ssub.s32 %s27, 1
      $region12: #{tpu_custom_call.1} parent=5 // pred_fallthru
        _
      %p392 = scmp.lt.s32.totalorder %s27, 4
      // Predicated region
      $region13: #{tpu_custom_call.1} parent=5 // pred_check
        %p393 = pneg %p392
      $region14: #{tpu_custom_call.1} parent=5 // pred_check_branch
        %395 = sbr.rel (%p393) target = $region16
      $region15: #{tpu_custom_call.1} parent=5 // pred_region
        // Predicated region
        $region17: #{tpu_custom_call.1} parent=15 // pred_check
          %p396 = pneg %p59
        $region18: #{tpu_custom_call.1} parent=15 // pred_check_branch
          %398 = sbr.rel (%p396) target = $region20
        $region19: #{tpu_custom_call.1} parent=15 // pred_region
          %s399 = sand.u32 %s49, 1
          %s400 = scalar_lea.sflag [#allocation4], %s399
          %s401 = sand.u32 %s49, 1
          %s402 = smul.addr %s401, 8
          %s403 = scalar_lea.vmem [#allocation3], %s402
          %s405 = ssub.s32 128, 128
          %406 = vsyncadd %s400, %s405
          %s407 = smul.addr %s34, 128
          %s408 = scalar_lea.hbm %s0, %s407
          %s410 = sshll.u32 %s403, 4
          %s411 = int_to_ptr.vmem [resolvable:$true] %s410
          %413 = dma.hbm_to_vmem [thread:$0]  %s408, 128, %s411, %s400
        $region20: #{tpu_custom_call.1} parent=15 // pred_fallthru
          _
        // Predicated region
        $region21: #{tpu_custom_call.1} parent=15 // pred_check
          %p414 = pneg %p85
        $region22: #{tpu_custom_call.1} parent=15 // pred_check_branch
          %416 = sbr.rel (%p414) target = $region24
        $region23: #{tpu_custom_call.1} parent=15 // pred_region
          %s417 = sand.u32 %s75, 1
          %s418 = scalar_lea.sflag [#allocation7], %s417
          %s419 = sand.u32 %s75, 1
          %s420 = smul.addr %s419, 4
          %s421 = scalar_lea.vmem [#allocation6], %s420
          %s423 = ssub.s32 64, 64
          %424 = vsyncadd %s418, %s423
          %s425 = smul.addr %s34, 64
          %s426 = scalar_lea.hbm %s1, %s425
          %s428 = sshll.u32 %s421, 4
          %s429 = int_to_ptr.vmem [resolvable:$true] %s428
          %431 = dma.hbm_to_vmem [thread:$0]  %s426, 64, %s429, %s418
        $region24: #{tpu_custom_call.1} parent=15 // pred_fallthru
          _
        // Predicated region
        $region25: #{tpu_custom_call.1} parent=15 // pred_check
          %p432 = pneg %p111
        $region26: #{tpu_custom_call.1} parent=15 // pred_check_branch
          %434 = sbr.rel (%p432) target = $region28
        $region27: #{tpu_custom_call.1} parent=15 // pred_region
          %p435 = scmp.lt.s32.totalorder %s35, 1
          %s436 = scalar_select %p435, %s35, 1
          %s437 = smul.addr %s436, 4
          %s438 = smul.addr %s437, 4
          %s439 = scalar_lea.vmem %s2, %s438
        $region28: #{tpu_custom_call.1} parent=15 // pred_fallthru
          _
        // Predicated region
        $region29: #{tpu_custom_call.1} parent=15 // pred_check
          %p440 = pneg %p137
        $region30: #{tpu_custom_call.1} parent=15 // pred_check_branch
          %442 = sbr.rel (%p440) target = $region32
        $region31: #{tpu_custom_call.1} parent=15 // pred_region
          %p443 = scmp.lt.s32.totalorder %s35, 1
          %s444 = scalar_select %p443, %s35, 1
          %s445 = smul.addr %s444, 4
          %s446 = smul.addr %s445, 4
          %s447 = scalar_lea.vmem %s3, %s446
        $region32: #{tpu_custom_call.1} parent=15 // pred_fallthru
          _
        // Predicated region
        $region33: #{tpu_custom_call.1} parent=15 // pred_check
          %p448 = pneg %p163
        $region34: #{tpu_custom_call.1} parent=15 // pred_check_branch
          %450 = sbr.rel (%p448) target = $region36
        $region35: #{tpu_custom_call.1} parent=15 // pred_region
          %p451 = scmp.lt.s32.totalorder %s35, 1
          %s452 = scalar_select %p451, %s35, 1
          %s453 = scalar_lea.vmem %s4, %s452
        $region36: #{tpu_custom_call.1} parent=15 // pred_fallthru
          _
        // Predicated region
        $region37: #{tpu_custom_call.1} parent=15 // pred_check
          %p454 = pneg %p189
        $region38: #{tpu_custom_call.1} parent=15 // pred_check_branch
          %456 = sbr.rel (%p454) target = $region40
        $region39: #{tpu_custom_call.1} parent=15 // pred_region
          %p457 = scmp.lt.s32.totalorder %s35, 1
          %s458 = scalar_select %p457, %s35, 1
          %s459 = scalar_lea.vmem %s5, %s458
        $region40: #{tpu_custom_call.1} parent=15 // pred_fallthru
          _
        // Predicated region
        $region41: #{tpu_custom_call.1} parent=15 // pred_check
          %p460 = pneg %p215
        $region42: #{tpu_custom_call.1} parent=15 // pred_check_branch
          %462 = sbr.rel (%p460) target = $region44
        $region43: #{tpu_custom_call.1} parent=15 // pred_region
          %p463 = scmp.lt.s32.totalorder %s35, 1
          %s464 = scalar_select %p463, %s35, 1
          %s465 = smul.addr %s464, 4
          %s466 = smul.addr %s465, 4
          %s467 = scalar_lea.vmem %s6, %s466
        $region44: #{tpu_custom_call.1} parent=15 // pred_fallthru
          _
        // Predicated region
        $region45: #{tpu_custom_call.1} parent=15 // pred_check
          %p468 = pneg %p241
        $region46: #{tpu_custom_call.1} parent=15 // pred_check_branch
          %470 = sbr.rel (%p468) target = $region48
        $region47: #{tpu_custom_call.1} parent=15 // pred_region
          %p471 = scmp.lt.s32.totalorder %s35, 1
          %s472 = scalar_select %p471, %s35, 1
          %s473 = scalar_lea.vmem %s7, %s472
        $region48: #{tpu_custom_call.1} parent=15 // pred_fallthru
          _
        // Predicated region
        $region49: #{tpu_custom_call.1} parent=15 // pred_check
          %p474 = pneg %p267
        $region50: #{tpu_custom_call.1} parent=15 // pred_check_branch
          %476 = sbr.rel (%p474) target = $region52
        $region51: #{tpu_custom_call.1} parent=15 // pred_region
          %p477 = scmp.lt.s32.totalorder %s35, 1
          %s478 = scalar_select %p477, %s35, 1
          %s479 = smul.addr %s478, 8
          %s480 = smul.addr %s479, 4
          %s481 = scalar_lea.vmem %s8, %s480
        $region52: #{tpu_custom_call.1} parent=15 // pred_fallthru
          _
        // Predicated region
        $region53: #{tpu_custom_call.1} parent=15 // pred_check
          %p482 = pneg %p293
        $region54: #{tpu_custom_call.1} parent=15 // pred_check_branch
          %484 = sbr.rel (%p482) target = $region56
        $region55: #{tpu_custom_call.1} parent=15 // pred_region
          %p485 = scmp.lt.s32.totalorder %s35, 1
          %s486 = scalar_select %p485, %s35, 1
          %s487 = scalar_lea.vmem %s9, %s486
        $region56: #{tpu_custom_call.1} parent=15 // pred_fallthru
          _
        // Predicated region
        $region57: #{tpu_custom_call.1} parent=15 // pred_check
          %p488 = pneg %p319
        $region58: #{tpu_custom_call.1} parent=15 // pred_check_branch
          %490 = sbr.rel (%p488) target = $region60
        $region59: #{tpu_custom_call.1} parent=15 // pred_region
          %p491 = scmp.lt.s32.totalorder %s35, 1
          %s492 = scalar_select %p491, %s35, 1
          %s493 = scalar_lea.vmem %s10, %s492
        $region60: #{tpu_custom_call.1} parent=15 // pred_fallthru
          _
        // Predicated region
        $region61: #{tpu_custom_call.1} parent=15 // pred_check
          %p494 = pneg %p345
        $region62: #{tpu_custom_call.1} parent=15 // pred_check_branch
          %496 = sbr.rel (%p494) target = $region64
        $region63: #{tpu_custom_call.1} parent=15 // pred_region
          %p497 = scmp.lt.s32.totalorder %s35, 1
          %s498 = scalar_select %p497, %s35, 1
          %s499 = scalar_lea.vmem %s11, %s498
        $region64: #{tpu_custom_call.1} parent=15 // pred_fallthru
          _
      $region16: #{tpu_custom_call.1} parent=5 // pred_fallthru
        _
      %p500 = scmp.le.s32.totalorder 1, %s27
      %p501 = scmp.lt.s32.totalorder %s27, 5
      %p502 = pnand %p500, %p501
      %p503 = pneg %p502
      // Predicated region
      $region65: #{tpu_custom_call.1} parent=5 // pred_check
        _
      $region66: #{tpu_custom_call.1} parent=5 // pred_check_branch
        %505 = sbr.rel (%p502) target = $region68
      $region67: #{tpu_custom_call.1} parent=5 // pred_region
        %s506 = ssub.s32 %s27, 1
        %s507 = sand.u32 %s52, 1
        %s508 = scalar_lea.sflag [#allocation4], %s507
        %s509 = sand.u32 %s52, 1
        %s510 = smul.addr %s509, 8
        %s511 = scalar_lea.vmem [#allocation3], %s510
        // Predicated region
        $region69: #{tpu_custom_call.1} parent=67 // pred_check
          %p512 = pneg %p65
        $region70: #{tpu_custom_call.1} parent=67 // pred_check_branch
          %514 = sbr.rel (%p512) target = $region72
        $region71: #{tpu_custom_call.1} parent=67 // pred_region
          %515 = dma.done %s508, 128
        $region72: #{tpu_custom_call.1} parent=67 // pred_fallthru
          _
        %s516 = sand.u32 %s78, 1
        %s517 = scalar_lea.sflag [#allocation7], %s516
        %s518 = sand.u32 %s78, 1
        %s519 = smul.addr %s518, 4
        %s520 = scalar_lea.vmem [#allocation6], %s519
        // Predicated region
        $region73: #{tpu_custom_call.1} parent=67 // pred_check
          %p521 = pneg %p91
        $region74: #{tpu_custom_call.1} parent=67 // pred_check_branch
          %523 = sbr.rel (%p521) target = $region76
        $region75: #{tpu_custom_call.1} parent=67 // pred_region
          %524 = dma.done %s517, 64
        $region76: #{tpu_custom_call.1} parent=67 // pred_fallthru
          _
        %s525 = sand.u32 %s52, 1
        %s526 = scalar_lea.sflag [#allocation4], %s525
        %s527 = sand.u32 %s52, 1
        %s528 = smul.addr %s527, 8
        %s529 = scalar_lea.vmem [#allocation3], %s528
        %p530 = pneg %p65
        %p531 = pneg %p62
        %s532 = sand.u32 %s78, 1
        %s533 = scalar_lea.sflag [#allocation7], %s532
        %s534 = sand.u32 %s78, 1
        %s535 = smul.addr %s534, 4
        %s536 = scalar_lea.vmem [#allocation6], %s535
        %p537 = pneg %p91
        %p538 = pneg %p88
        %p539 = scmp.lt.s32.totalorder %s37, 1
        %s540 = scalar_select %p539, %s37, 1
        %s541 = smul.addr %s540, 4
        %s542 = smul.addr %s541, 4
        %s543 = scalar_lea.vmem %s2, %s542
        %p544 = pneg %p117
        %p545 = pneg %p114
        %p546 = scmp.lt.s32.totalorder %s37, 1
        %s547 = scalar_select %p546, %s37, 1
        %s548 = smul.addr %s547, 4
        %s549 = smul.addr %s548, 4
        %s550 = scalar_lea.vmem %s3, %s549
        %p551 = pneg %p143
        %p552 = pneg %p140
        %p553 = scmp.lt.s32.totalorder %s37, 1
        %s554 = scalar_select %p553, %s37, 1
        %s555 = scalar_lea.vmem %s4, %s554
        %p556 = pneg %p169
        %p557 = pneg %p166
        %p558 = scmp.lt.s32.totalorder %s37, 1
        %s559 = scalar_select %p558, %s37, 1
        %s560 = scalar_lea.vmem %s5, %s559
        %p561 = pneg %p195
        %p562 = pneg %p192
        %p563 = scmp.lt.s32.totalorder %s37, 1
        %s564 = scalar_select %p563, %s37, 1
        %s565 = smul.addr %s564, 4
        %s566 = smul.addr %s565, 4
        %s567 = scalar_lea.vmem %s6, %s566
        %p568 = pneg %p221
        %p569 = pneg %p218
        %p570 = scmp.lt.s32.totalorder %s37, 1
        %s571 = scalar_select %p570, %s37, 1
        %s572 = scalar_lea.vmem %s7, %s571
        %p573 = pneg %p247
        %p574 = pneg %p244
        %p575 = scmp.lt.s32.totalorder %s37, 1
        %s576 = scalar_select %p575, %s37, 1
        %s577 = smul.addr %s576, 8
        %s578 = smul.addr %s577, 4
        %s579 = scalar_lea.vmem %s8, %s578
        %p580 = pneg %p273
        %p581 = pneg %p270
        %p582 = scmp.lt.s32.totalorder %s37, 1
        %s583 = scalar_select %p582, %s37, 1
        %s584 = scalar_lea.vmem %s9, %s583
        %p585 = pneg %p299
        %p586 = pneg %p296
        %p587 = scmp.lt.s32.totalorder %s37, 1
        %s588 = scalar_select %p587, %s37, 1
        %s589 = scalar_lea.vmem %s10, %s588
        %p590 = pneg %p325
        %p591 = pneg %p322
        %p592 = scmp.lt.s32.totalorder %s37, 1
        %s593 = scalar_select %p592, %s37, 1
        %s594 = scalar_lea.vmem %s11, %s593
        %p595 = pneg %p351
        %p596 = pneg %p348
        %p597 = pneg %p377
        %p598 = pneg %p374
        %s599 = sand.u32 %s364, 1
        %s600 = scalar_lea.sflag [#allocation5], %s599
        %s601 = sand.u32 %s364, 1
        %s602 = smul.addr %s601, 8
        %s603 = scalar_lea.vmem [#allocation8], %s602
        %p604 = scmp.lt.s32.totalorder %s37, 1
        %s605 = scalar_select %p604, %s37, 1
        %s606 = smul.addr %s605, 4
        %s607 = smul.addr %s606, 4
        %s608 = scalar_lea.vmem %s2, %s607
        %p609 = scmp.lt.s32.totalorder %s37, 1
        %s610 = scalar_select %p609, %s37, 1
        %s611 = smul.addr %s610, 4
        %s612 = smul.addr %s611, 4
        %s613 = scalar_lea.vmem %s3, %s612
        %p614 = scmp.lt.s32.totalorder %s37, 1
        %s615 = scalar_select %p614, %s37, 1
        %s616 = scalar_lea.vmem %s4, %s615
        %p617 = scmp.lt.s32.totalorder %s37, 1
        %s618 = scalar_select %p617, %s37, 1
        %s619 = scalar_lea.vmem %s5, %s618
        %p620 = scmp.lt.s32.totalorder %s37, 1
        %s621 = scalar_select %p620, %s37, 1
        %s622 = smul.addr %s621, 4
        %s623 = smul.addr %s622, 4
        %s624 = scalar_lea.vmem %s6, %s623
        %p625 = scmp.lt.s32.totalorder %s37, 1
        %s626 = scalar_select %p625, %s37, 1
        %s627 = scalar_lea.vmem %s7, %s626
        %p628 = scmp.lt.s32.totalorder %s37, 1
        %s629 = scalar_select %p628, %s37, 1
        %s630 = smul.addr %s629, 8
        %s631 = smul.addr %s630, 4
        %s632 = scalar_lea.vmem %s8, %s631
        %p633 = scmp.lt.s32.totalorder %s37, 1
        %s634 = scalar_select %p633, %s37, 1
        %s635 = scalar_lea.vmem %s9, %s634
        %p636 = scmp.lt.s32.totalorder %s37, 1
        %s637 = scalar_select %p636, %s37, 1
        %s638 = scalar_lea.vmem %s10, %s637
        %p639 = scmp.lt.s32.totalorder %s37, 1
        %s640 = scalar_select %p639, %s37, 1
        %s641 = scalar_lea.vmem %s11, %s640
        %p643 = scmp.eq.s32.totalorder %s37, 0
        // Predicated region
        $region77: #{tpu_custom_call.1} parent=67 // pred_check
          %p644 = pneg %p643
        $region78: #{tpu_custom_call.1} parent=67 // pred_check_branch
          %646 = sbr.rel (%p644) target = $region80
        $region79: #{tpu_custom_call.1} parent=67 // pred_region
          %v647 = vld [vmem:[%s511] sm:$0xff]
          %vm648 = vcmask 261120
          %649 = vst.msk [vmem:[#allocation2] sm:$0xff] %vm648, %v647
        $region80: #{tpu_custom_call.1} parent=67 // pred_fallthru
          _
        %v650 = vld [vmem:[#allocation2] sm:$0xff]
        %v651 = vld [vmem:[%s520] sm:$0xf]
        %v652 = vunpack.c.l.bf16 %v651
        %v653 = vpack.c.bf16 %v650, %v650
        %v654 = vld [vmem:[%s608] sm:$0xf]
        %v655 = vld [vmem:[%s608 + $0x4] sm:$0xf]
        %v656 = vld [vmem:[%s608 + $0x8] sm:$0xf]
        %v657 = vld [vmem:[%s608 + $0xc] sm:$0xf]
        %v662 = vunpack.c.l.b16 %v654
        %v663 = vunpack.c.l.b16 %v655
        %v664 = vunpack.c.l.b16 %v656
        %v665 = vunpack.c.l.b16 %v657
        %v666 = vpack.c.b16 %v663, %v662
        %v667 = vpack.c.b16 %v665, %v664
        %vm670 = vcmask 261120
        %v672 = vsel %vm670, %v653, 0
        %674 = vmatprep.subr.bf16.mxu0 0
        %675 = vmatpush1.bf16.msra.mxu0 %v666
        %676 = vmatprep.subr.bf16.mxu0 0
        %677 = vmatpush1.bf16.msra.mxu0 %v667
        %678 = vmatprep.subr.bf16.mxu0 0
        %679 = vmatpush1.bf16.msra.mxu0 0
        %680 = vmatprep.subr.bf16.mxu0 0
        %681 = vmatpush1.bf16.msra.mxu0 0
        %682 = vmatprep.subr.bf16.mxu0 0
        %683 = vmatpush1.bf16.msra.mxu0 0
        %684 = vmatprep.subr.bf16.mxu0 0
        %685 = vmatpush1.bf16.msra.mxu0 0
        %686 = vmatprep.subr.bf16.mxu0 0
        %687 = vmatpush1.bf16.msra.mxu0 0
        %688 = vmatprep.subr.bf16.mxu0 0
        %689 = vmatpush1.bf16.msra.mxu0 0
        %690 = vmatprep.subr.bf16.mxu0 0
        %691 = vmatpush1.bf16.msra.mxu0 0
        %692 = vmatprep.subr.bf16.mxu0 0
        %693 = vmatpush1.bf16.msra.mxu0 0
        %694 = vmatprep.subr.bf16.mxu0 0
        %695 = vmatpush1.bf16.msra.mxu0 0
        %696 = vmatprep.subr.bf16.mxu0 0
        %697 = vmatpush1.bf16.msra.mxu0 0
        %698 = vmatprep.subr.bf16.mxu0 0
        %699 = vmatpush1.bf16.msra.mxu0 0
        %700 = vmatprep.subr.bf16.mxu0 0
        %701 = vmatpush1.bf16.msra.mxu0 0
        %702 = vmatprep.subr.bf16.mxu0 0
        %703 = vmatpush1.bf16.msra.mxu0 0
        %704 = vmatprep.subr.bf16.mxu0 0
        %705 = vmatpush1.bf16.msra.mxu0 0
        %706 = vmatprep.mubr.bf16.mxu0 0
        %707 = vmatmul.mubr.bf16.gmra.mrb[0].mxu0 %v672
        %v708 = vpop.f32.mrb[0].mxu0
        %v709 = vadd.f32 0.0, %v708
        %v710 = vpop.f32.mrb[0].mxu0
        %v711 = vpop.f32.mrb[0].mxu0
        %v712 = vpop.f32.mrb[0].mxu0
        %713 = vdwg.mxu0
        %v714 = vmul.f32 %v709, 0.35355338
        %716 = vrot.lane.b32.xlu0 %v714, 120
        %v717 = vpop.permute.xlu0 %716
        %719 = vrot.lane.b32.xlu0 %v714, 112
        %v720 = vpop.permute.xlu0 %719
        %722 = vrot.lane.b32.xlu0 %v714, 104
        %v723 = vpop.permute.xlu0 %722
        %v725 = vcombine.low %v714, %v720
        %v726 = vcombine.high %v714, %v720
        %v728 = vunpack.c.l.s4 1983009808
        %v729 = vunpack.c.0.s8 %v728
        %v730 = vlaneseq
        %v731 = vshrl.u32 %v730, 7
        %v732 = vsub.s32 %v729, %v731
        %v733 = vrot.slane %v725, %v732
        %v735 = vunpack.c.l.s4 1983009808
        %v736 = vunpack.c.0.s8 %v735
        %v737 = vlaneseq
        %v738 = vshrl.u32 %v737, 7
        %v739 = vsub.s32 %v736, %v738
        %v740 = vrot.slane %v726, %v739
        %v741 = vcombine.low %v717, %v723
        %v742 = vcombine.high %v717, %v723
        %v744 = vunpack.c.l.s4 1983009808
        %v745 = vunpack.c.0.s8 %v744
        %v746 = vlaneseq
        %v747 = vshrl.u32 %v746, 7
        %v748 = vsub.s32 %v745, %v747
        %v749 = vrot.slane %v741, %v748
        %v751 = vunpack.c.l.s4 1983009808
        %v752 = vunpack.c.0.s8 %v751
        %v753 = vlaneseq
        %v754 = vshrl.u32 %v753, 7
        %v755 = vsub.s32 %v752, %v754
        %v756 = vrot.slane %v742, %v755
        %v757 = vcombine.low %v733, %v749
        %v758 = vcombine.high %v733, %v749
        %v760 = vunpack.c.l.s4 1934713408
        %v761 = vunpack.c.0.s8 %v760
        %v762 = vlaneseq
        %v763 = vshrl.u32 %v762, 7
        %v764 = vsub.s32 %v761, %v763
        %v765 = vrot.slane %v757, %v764
        %v767 = vunpack.c.l.s4 1934713408
        %v768 = vunpack.c.0.s8 %v767
        %v769 = vlaneseq
        %v770 = vshrl.u32 %v769, 7
        %v771 = vsub.s32 %v768, %v770
        %v772 = vrot.slane %v758, %v771
        %v773 = vcombine.low %v740, %v756
        %v774 = vcombine.high %v740, %v756
        %v776 = vunpack.c.l.s4 1934713408
        %v777 = vunpack.c.0.s8 %v776
        %v778 = vlaneseq
        %v779 = vshrl.u32 %v778, 7
        %v780 = vsub.s32 %v777, %v779
        %v781 = vrot.slane %v773, %v780
        %v783 = vunpack.c.l.s4 1934713408
        %v784 = vunpack.c.0.s8 %v783
        %v785 = vlaneseq
        %v786 = vshrl.u32 %v785, 7
        %v787 = vsub.s32 %v784, %v786
        %v788 = vrot.slane %v774, %v787
        %v789 = vcombine.high %v765, 0.0
        %v790 = vcombine.high %v772, 0.0
        %v791 = vcombine.high %v781, 0.0
        %v792 = vcombine.high %v788, 0.0
        %v793 = vpack.c.bf16 %v765, %v765
        %v794 = vpack.c.bf16 %v789, %v789
        %v795 = vpack.c.bf16 %v772, %v772
        %v796 = vpack.c.bf16 %v790, %v790
        %v797 = vpack.c.bf16 %v781, %v781
        %v798 = vpack.c.bf16 %v791, %v791
        %v799 = vpack.c.bf16 %v788, %v788
        %v800 = vpack.c.bf16 %v792, %v792
        %802 = vrot.lane.b32.xlu0 %v709, 120
        %v803 = vpop.permute.xlu0 %802
        %804 = vrot.lane.b32.xlu0 %v709, 112
        %v805 = vpop.permute.xlu0 %804
        %806 = vrot.lane.b32.xlu0 %v709, 104
        %v807 = vpop.permute.xlu0 %806
        %808 = vrot.lane.b32.xlu0 %v709, 96
        %v809 = vpop.permute.xlu0 %808
        %810 = vrot.lane.b32.xlu0 %v803, 96
        %v811 = vpop.permute.xlu0 %810
        %812 = vrot.lane.b32.xlu0 %v805, 96
        %v813 = vpop.permute.xlu0 %812
        %814 = vrot.lane.b32.xlu0 %v807, 96
        %v815 = vpop.permute.xlu0 %814
        %v820 = vcombine.low %v809, %v813
        %v821 = vcombine.high %v809, %v813
        %v823 = vunpack.c.l.s4 1983009808
        %v824 = vunpack.c.0.s8 %v823
        %v825 = vlaneseq
        %v826 = vshrl.u32 %v825, 7
        %v827 = vsub.s32 %v824, %v826
        %v828 = vrot.slane %v820, %v827
        %v830 = vunpack.c.l.s4 1983009808
        %v831 = vunpack.c.0.s8 %v830
        %v832 = vlaneseq
        %v833 = vshrl.u32 %v832, 7
        %v834 = vsub.s32 %v831, %v833
        %v835 = vrot.slane %v821, %v834
        %v836 = vcombine.low %v811, %v815
        %v837 = vcombine.high %v811, %v815
        %v839 = vunpack.c.l.s4 1983009808
        %v840 = vunpack.c.0.s8 %v839
        %v841 = vlaneseq
        %v842 = vshrl.u32 %v841, 7
        %v843 = vsub.s32 %v840, %v842
        %v844 = vrot.slane %v836, %v843
        %v846 = vunpack.c.l.s4 1983009808
        %v847 = vunpack.c.0.s8 %v846
        %v848 = vlaneseq
        %v849 = vshrl.u32 %v848, 7
        %v850 = vsub.s32 %v847, %v849
        %v851 = vrot.slane %v837, %v850
        %v852 = vcombine.low %v828, %v844
        %v853 = vcombine.high %v828, %v844
        %v855 = vunpack.c.l.s4 1934713408
        %v856 = vunpack.c.0.s8 %v855
        %v857 = vlaneseq
        %v858 = vshrl.u32 %v857, 7
        %v859 = vsub.s32 %v856, %v858
        %v860 = vrot.slane %v852, %v859
        %v862 = vunpack.c.l.s4 1934713408
        %v863 = vunpack.c.0.s8 %v862
        %v864 = vlaneseq
        %v865 = vshrl.u32 %v864, 7
        %v866 = vsub.s32 %v863, %v865
        %v867 = vrot.slane %v853, %v866
        %v868 = vcombine.low %v835, %v851
        %v869 = vcombine.high %v835, %v851
        %v871 = vunpack.c.l.s4 1934713408
        %v872 = vunpack.c.0.s8 %v871
        %v873 = vlaneseq
        %v874 = vshrl.u32 %v873, 7
        %v875 = vsub.s32 %v872, %v874
        %v876 = vrot.slane %v868, %v875
        %v878 = vunpack.c.l.s4 1934713408
        %v879 = vunpack.c.0.s8 %v878
        %v880 = vlaneseq
        %v881 = vshrl.u32 %v880, 7
        %v882 = vsub.s32 %v879, %v881
        %v883 = vrot.slane %v869, %v882
        %v884 = vcombine.high %v860, 0.0
        %v885 = vcombine.high %v867, 0.0
        %v886 = vcombine.high %v876, 0.0
        %v887 = vcombine.high %v883, 0.0
        %v888 = vpack.c.bf16 %v860, %v860
        %v889 = vpack.c.bf16 %v884, %v884
        %v890 = vpack.c.bf16 %v867, %v867
        %v891 = vpack.c.bf16 %v885, %v885
        %v892 = vpack.c.bf16 %v876, %v876
        %v893 = vpack.c.bf16 %v886, %v886
        %v894 = vpack.c.bf16 %v883, %v883
        %v895 = vpack.c.bf16 %v887, %v887
        %896 = vrot.lane.b32.xlu0 %v709, 64
        %v897 = vpop.permute.xlu0 %896
        %898 = vrot.lane.b32.xlu0 %v803, 64
        %v899 = vpop.permute.xlu0 %898
        %900 = vrot.lane.b32.xlu0 %v805, 64
        %v901 = vpop.permute.xlu0 %900
        %902 = vrot.lane.b32.xlu0 %v807, 64
        %v903 = vpop.permute.xlu0 %902
        %v908 = vcombine.low %v897, %v901
        %v909 = vcombine.high %v897, %v901
        %v911 = vunpack.c.l.s4 1983009808
        %v912 = vunpack.c.0.s8 %v911
        %v913 = vlaneseq
        %v914 = vshrl.u32 %v913, 7
        %v915 = vsub.s32 %v912, %v914
        %v916 = vrot.slane %v908, %v915
        %v918 = vunpack.c.l.s4 1983009808
        %v919 = vunpack.c.0.s8 %v918
        %v920 = vlaneseq
        %v921 = vshrl.u32 %v920, 7
        %v922 = vsub.s32 %v919, %v921
        %v923 = vrot.slane %v909, %v922
        %v924 = vcombine.low %v899, %v903
        %v925 = vcombine.high %v899, %v903
        %v927 = vunpack.c.l.s4 1983009808
        %v928 = vunpack.c.0.s8 %v927
        %v929 = vlaneseq
        %v930 = vshrl.u32 %v929, 7
        %v931 = vsub.s32 %v928, %v930
        %v932 = vrot.slane %v924, %v931
        %v934 = vunpack.c.l.s4 1983009808
        %v935 = vunpack.c.0.s8 %v934
        %v936 = vlaneseq
        %v937 = vshrl.u32 %v936, 7
        %v938 = vsub.s32 %v935, %v937
        %v939 = vrot.slane %v925, %v938
        %v940 = vcombine.low %v916, %v932
        %v941 = vcombine.high %v916, %v932
        %v943 = vunpack.c.l.s4 1934713408
        %v944 = vunpack.c.0.s8 %v943
        %v945 = vlaneseq
        %v946 = vshrl.u32 %v945, 7
        %v947 = vsub.s32 %v944, %v946
        %v948 = vrot.slane %v940, %v947
        %v950 = vunpack.c.l.s4 1934713408
        %v951 = vunpack.c.0.s8 %v950
        %v952 = vlaneseq
        %v953 = vshrl.u32 %v952, 7
        %v954 = vsub.s32 %v951, %v953
        %v955 = vrot.slane %v941, %v954
        %v956 = vcombine.low %v923, %v939
        %v957 = vcombine.high %v923, %v939
        %v959 = vunpack.c.l.s4 1934713408
        %v960 = vunpack.c.0.s8 %v959
        %v961 = vlaneseq
        %v962 = vshrl.u32 %v961, 7
        %v963 = vsub.s32 %v960, %v962
        %v964 = vrot.slane %v956, %v963
        %v966 = vunpack.c.l.s4 1934713408
        %v967 = vunpack.c.0.s8 %v966
        %v968 = vlaneseq
        %v969 = vshrl.u32 %v968, 7
        %v970 = vsub.s32 %v967, %v969
        %v971 = vrot.slane %v957, %v970
        %v972 = vcombine.high %v948, 0.0
        %v973 = vcombine.high %v955, 0.0
        %v974 = vcombine.high %v964, 0.0
        %v975 = vcombine.high %v971, 0.0
        %v976 = vpack.c.bf16 %v948, %v948
        %v977 = vpack.c.bf16 %v972, %v972
        %v978 = vpack.c.bf16 %v955, %v955
        %v979 = vpack.c.bf16 %v973, %v973
        %v980 = vpack.c.bf16 %v964, %v964
        %v981 = vpack.c.bf16 %v974, %v974
        %v982 = vpack.c.bf16 %v971, %v971
        %v983 = vpack.c.bf16 %v975, %v975
        %v984 = vcombine.low %v793, %v797
        %v986 = vunpack.c.l.s4 1983009808
        %v987 = vunpack.c.0.s8 %v986
        %v988 = vlaneseq
        %v989 = vshrl.u32 %v988, 7
        %v990 = vsub.s32 %v987, %v989
        %v991 = vrot.slane %v984, %v990
        %v992 = vcombine.low %v795, %v799
        %v994 = vunpack.c.l.s4 1983009808
        %v995 = vunpack.c.0.s8 %v994
        %v996 = vlaneseq
        %v997 = vshrl.u32 %v996, 7
        %v998 = vsub.s32 %v995, %v997
        %v999 = vrot.slane %v992, %v998
        %v1000 = vcombine.low %v991, %v999
        %v1002 = vunpack.c.l.s4 1934713408
        %v1003 = vunpack.c.0.s8 %v1002
        %v1004 = vlaneseq
        %v1005 = vshrl.u32 %v1004, 7
        %v1006 = vsub.s32 %v1003, %v1005
        %v1007 = vrot.slane %v1000, %v1006
        %v1008 = vcombine.high %v1007, 0
        %v1009 = vcombine.low %v794, %v798
        %v1011 = vunpack.c.l.s4 1983009808
        %v1012 = vunpack.c.0.s8 %v1011
        %v1013 = vlaneseq
        %v1014 = vshrl.u32 %v1013, 7
        %v1015 = vsub.s32 %v1012, %v1014
        %v1016 = vrot.slane %v1009, %v1015
        %v1017 = vcombine.low %v796, %v800
        %v1019 = vunpack.c.l.s4 1983009808
        %v1020 = vunpack.c.0.s8 %v1019
        %v1021 = vlaneseq
        %v1022 = vshrl.u32 %v1021, 7
        %v1023 = vsub.s32 %v1020, %v1022
        %v1024 = vrot.slane %v1017, %v1023
        %v1025 = vcombine.low %v1016, %v1024
        %v1027 = vunpack.c.l.s4 1934713408
        %v1028 = vunpack.c.0.s8 %v1027
        %v1029 = vlaneseq
        %v1030 = vshrl.u32 %v1029, 7
        %v1031 = vsub.s32 %v1028, %v1030
        %v1032 = vrot.slane %v1025, %v1031
        %v1033 = vcombine.high %v1032, 0
        %v1036 = vpack.i.b16 %v1032, %v1007
        %v1037 = vshrl.u32 %v1007, 16
        %v1038 = vshrl.u32 %v1032, 16
        %v1039 = vpack.i.b16 %v1038, %v1037
        %v1042 = vpack.i.b16 %v1033, %v1008
        %v1043 = vshrl.u32 %v1008, 16
        %v1044 = vshrl.u32 %v1033, 16
        %v1045 = vpack.i.b16 %v1044, %v1043
        %1046 = vxpose.xlu0.c.b16.start [1/8] %v888, 128
        %1047 = vxpose.xlu0.c.b16.cont [2/8] 0, 128
        %1048 = vxpose.xlu0.c.b16.cont [3/8] 0, 128
        %1049 = vxpose.xlu0.c.b16.cont [4/8] 0, 128
        %1050 = vxpose.xlu0.c.b16.cont [5/8] 0, 128
        %1051 = vxpose.xlu0.c.b16.cont [6/8] 0, 128
        %1052 = vxpose.xlu0.c.b16.cont [7/8] 0, 128
        %1053 = vxpose.xlu0.c.b16.end [8/8] 0, 128
        %v1054 = vpop.trf.xlu0
        %v1055 = vpop.trf.xlu0
        %v1056 = vpop.trf.xlu0
        %v1057 = vpop.trf.xlu0
        %v1058 = vpop.trf.xlu0
        %v1059 = vpop.trf.xlu0
        %v1060 = vpop.trf.xlu0
        %v1061 = vpop.trf.xlu0
        %1062 = vxpose.xlu0.c.b16.start [1/8] %v889, 128
        %1063 = vxpose.xlu0.c.b16.cont [2/8] 0, 128
        %1064 = vxpose.xlu0.c.b16.cont [3/8] 0, 128
        %1065 = vxpose.xlu0.c.b16.cont [4/8] 0, 128
        %1066 = vxpose.xlu0.c.b16.cont [5/8] 0, 128
        %1067 = vxpose.xlu0.c.b16.cont [6/8] 0, 128
        %1068 = vxpose.xlu0.c.b16.cont [7/8] 0, 128
        %1069 = vxpose.xlu0.c.b16.end [8/8] 0, 128
        %v1070 = vpop.trf.xlu0
        %v1071 = vpop.trf.xlu0
        %v1072 = vpop.trf.xlu0
        %v1073 = vpop.trf.xlu0
        %v1074 = vpop.trf.xlu0
        %v1075 = vpop.trf.xlu0
        %v1076 = vpop.trf.xlu0
        %v1077 = vpop.trf.xlu0
        %1078 = vxpose.xlu0.c.b16.start [1/8] %v890, 128
        %1079 = vxpose.xlu0.c.b16.cont [2/8] 0, 128
        %1080 = vxpose.xlu0.c.b16.cont [3/8] 0, 128
        %1081 = vxpose.xlu0.c.b16.cont [4/8] 0, 128
        %1082 = vxpose.xlu0.c.b16.cont [5/8] 0, 128
        %1083 = vxpose.xlu0.c.b16.cont [6/8] 0, 128
        %1084 = vxpose.xlu0.c.b16.cont [7/8] 0, 128
        %1085 = vxpose.xlu0.c.b16.end [8/8] 0, 128
        %v1086 = vpop.trf.xlu0
        %v1087 = vpop.trf.xlu0
        %v1088 = vpop.trf.xlu0
        %v1089 = vpop.trf.xlu0
        %v1090 = vpop.trf.xlu0
        %v1091 = vpop.trf.xlu0
        %v1092 = vpop.trf.xlu0
        %v1093 = vpop.trf.xlu0
        %1094 = vxpose.xlu0.c.b16.start [1/8] %v891, 128
        %1095 = vxpose.xlu0.c.b16.cont [2/8] 0, 128
        %1096 = vxpose.xlu0.c.b16.cont [3/8] 0, 128
        %1097 = vxpose.xlu0.c.b16.cont [4/8] 0, 128
        %1098 = vxpose.xlu0.c.b16.cont [5/8] 0, 128
        %1099 = vxpose.xlu0.c.b16.cont [6/8] 0, 128
        %1100 = vxpose.xlu0.c.b16.cont [7/8] 0, 128
        %1101 = vxpose.xlu0.c.b16.end [8/8] 0, 128
        %v1102 = vpop.trf.xlu0
        %v1103 = vpop.trf.xlu0
        %v1104 = vpop.trf.xlu0
        %v1105 = vpop.trf.xlu0
        %v1106 = vpop.trf.xlu0
        %v1107 = vpop.trf.xlu0
        %v1108 = vpop.trf.xlu0
        %v1109 = vpop.trf.xlu0
        %1110 = vxpose.xlu0.c.b16.start [1/8] %v892, 128
        %1111 = vxpose.xlu0.c.b16.cont [2/8] 0, 128
        %1112 = vxpose.xlu0.c.b16.cont [3/8] 0, 128
        %1113 = vxpose.xlu0.c.b16.cont [4/8] 0, 128
        %1114 = vxpose.xlu0.c.b16.cont [5/8] 0, 128
        %1115 = vxpose.xlu0.c.b16.cont [6/8] 0, 128
        %1116 = vxpose.xlu0.c.b16.cont [7/8] 0, 128
        %1117 = vxpose.xlu0.c.b16.end [8/8] 0, 128
        %v1118 = vpop.trf.xlu0
        %v1119 = vpop.trf.xlu0
        %v1120 = vpop.trf.xlu0
        %v1121 = vpop.trf.xlu0
        %v1122 = vpop.trf.xlu0
        %v1123 = vpop.trf.xlu0
        %v1124 = vpop.trf.xlu0
        %v1125 = vpop.trf.xlu0
        %1126 = vxpose.xlu0.c.b16.start [1/8] %v893, 128
        %1127 = vxpose.xlu0.c.b16.cont [2/8] 0, 128
        %1128 = vxpose.xlu0.c.b16.cont [3/8] 0, 128
        %1129 = vxpose.xlu0.c.b16.cont [4/8] 0, 128
        %1130 = vxpose.xlu0.c.b16.cont [5/8] 0, 128
        %1131 = vxpose.xlu0.c.b16.cont [6/8] 0, 128
        %1132 = vxpose.xlu0.c.b16.cont [7/8] 0, 128
        %1133 = vxpose.xlu0.c.b16.end [8/8] 0, 128
        %v1134 = vpop.trf.xlu0
        %v1135 = vpop.trf.xlu0
        %v1136 = vpop.trf.xlu0
        %v1137 = vpop.trf.xlu0
        %v1138 = vpop.trf.xlu0
        %v1139 = vpop.trf.xlu0
        %v1140 = vpop.trf.xlu0
        %v1141 = vpop.trf.xlu0
        %1142 = vxpose.xlu0.c.b16.start [1/8] %v894, 128
        %1143 = vxpose.xlu0.c.b16.cont [2/8] 0, 128
        %1144 = vxpose.xlu0.c.b16.cont [3/8] 0, 128
        %1145 = vxpose.xlu0.c.b16.cont [4/8] 0, 128
        %1146 = vxpose.xlu0.c.b16.cont [5/8] 0, 128
        %1147 = vxpose.xlu0.c.b16.cont [6/8] 0, 128
        %1148 = vxpose.xlu0.c.b16.cont [7/8] 0, 128
        %1149 = vxpose.xlu0.c.b16.end [8/8] 0, 128
        %v1150 = vpop.trf.xlu0
        %v1151 = vpop.trf.xlu0
        %v1152 = vpop.trf.xlu0
        %v1153 = vpop.trf.xlu0
        %v1154 = vpop.trf.xlu0
        %v1155 = vpop.trf.xlu0
        %v1156 = vpop.trf.xlu0
        %v1157 = vpop.trf.xlu0
        %1158 = vxpose.xlu0.c.b16.start [1/8] %v895, 128
        %1159 = vxpose.xlu0.c.b16.cont [2/8] 0, 128
        %1160 = vxpose.xlu0.c.b16.cont [3/8] 0, 128
        %1161 = vxpose.xlu0.c.b16.cont [4/8] 0, 128
        %1162 = vxpose.xlu0.c.b16.cont [5/8] 0, 128
        %1163 = vxpose.xlu0.c.b16.cont [6/8] 0, 128
        %1164 = vxpose.xlu0.c.b16.cont [7/8] 0, 128
        %1165 = vxpose.xlu0.c.b16.end [8/8] 0, 128
        %v1166 = vpop.trf.xlu0
        %v1167 = vpop.trf.xlu0
        %v1168 = vpop.trf.xlu0
        %v1169 = vpop.trf.xlu0
        %v1170 = vpop.trf.xlu0
        %v1171 = vpop.trf.xlu0
        %v1172 = vpop.trf.xlu0
        %v1173 = vpop.trf.xlu0
        %v1174 = vcombine.low %v1054, %v1118
        %v1176 = vunpack.c.l.s4 1983009808
        %v1177 = vunpack.c.0.s8 %v1176
        %v1178 = vlaneseq
        %v1179 = vshrl.u32 %v1178, 7
        %v1180 = vsub.s32 %v1177, %v1179
        %v1181 = vrot.slane %v1174, %v1180
        %v1182 = vcombine.low %v1086, %v1150
        %v1184 = vunpack.c.l.s4 1983009808
        %v1185 = vunpack.c.0.s8 %v1184
        %v1186 = vlaneseq
        %v1187 = vshrl.u32 %v1186, 7
        %v1188 = vsub.s32 %v1185, %v1187
        %v1189 = vrot.slane %v1182, %v1188
        %v1190 = vcombine.low %v1181, %v1189
        %v1191 = vcombine.high %v1181, %v1189
        %v1193 = vunpack.c.l.s4 1934713408
        %v1194 = vunpack.c.0.s8 %v1193
        %v1195 = vlaneseq
        %v1196 = vshrl.u32 %v1195, 7
        %v1197 = vsub.s32 %v1194, %v1196
        %v1198 = vrot.slane %v1190, %v1197
        %v1200 = vunpack.c.l.s4 1934713408
        %v1201 = vunpack.c.0.s8 %v1200
        %v1202 = vlaneseq
        %v1203 = vshrl.u32 %v1202, 7
        %v1204 = vsub.s32 %v1201, %v1203
        %v1205 = vrot.slane %v1191, %v1204
        %v1206 = vcombine.high %v1198, 0
        %v1207 = vcombine.high %v1205, 0
        %v1208 = vcombine.low %v1070, %v1134
        %v1210 = vunpack.c.l.s4 1983009808
        %v1211 = vunpack.c.0.s8 %v1210
        %v1212 = vlaneseq
        %v1213 = vshrl.u32 %v1212, 7
        %v1214 = vsub.s32 %v1211, %v1213
        %v1215 = vrot.slane %v1208, %v1214
        %v1216 = vcombine.low %v1102, %v1166
        %v1218 = vunpack.c.l.s4 1983009808
        %v1219 = vunpack.c.0.s8 %v1218
        %v1220 = vlaneseq
        %v1221 = vshrl.u32 %v1220, 7
        %v1222 = vsub.s32 %v1219, %v1221
        %v1223 = vrot.slane %v1216, %v1222
        %v1224 = vcombine.low %v1215, %v1223
        %v1225 = vcombine.high %v1215, %v1223
        %v1227 = vunpack.c.l.s4 1934713408
        %v1228 = vunpack.c.0.s8 %v1227
        %v1229 = vlaneseq
        %v1230 = vshrl.u32 %v1229, 7
        %v1231 = vsub.s32 %v1228, %v1230
        %v1232 = vrot.slane %v1224, %v1231
        %v1234 = vunpack.c.l.s4 1934713408
        %v1235 = vunpack.c.0.s8 %v1234
        %v1236 = vlaneseq
        %v1237 = vshrl.u32 %v1236, 7
        %v1238 = vsub.s32 %v1235, %v1237
        %v1239 = vrot.slane %v1225, %v1238
        %v1240 = vcombine.high %v1232, 0
        %v1241 = vcombine.high %v1239, 0
        %v1244 = vpack.i.b16 %v1232, %v1198
        %v1246 = vshrl.u32 %v1198, 16
        %v1247 = vshrl.u32 %v1232, 16
        %v1248 = vpack.i.b16 %v1247, %v1246
        %v1252 = vpack.i.b16 %v1240, %v1206
        %v1254 = vshrl.u32 %v1206, 16
        %v1255 = vshrl.u32 %v1240, 16
        %v1256 = vpack.i.b16 %v1255, %v1254
        %v1260 = vpack.i.b16 %v1239, %v1205
        %v1262 = vshrl.u32 %v1205, 16
        %v1263 = vshrl.u32 %v1239, 16
        %v1264 = vpack.i.b16 %v1263, %v1262
        %v1268 = vpack.i.b16 %v1241, %v1207
        %v1270 = vshrl.u32 %v1207, 16
        %v1271 = vshrl.u32 %v1241, 16
        %v1272 = vpack.i.b16 %v1271, %v1270
        %1274 = vxpose.xlu0.c.b16.start [1/8] %v1244, 128
        %1275 = vxpose.xlu0.c.b16.cont [2/8] 0, 128
        %1276 = vxpose.xlu0.c.b16.cont [3/8] 0, 128
        %1277 = vxpose.xlu0.c.b16.cont [4/8] 0, 128
        %1278 = vxpose.xlu0.c.b16.cont [5/8] 0, 128
        %1279 = vxpose.xlu0.c.b16.cont [6/8] 0, 128
        %1280 = vxpose.xlu0.c.b16.cont [7/8] 0, 128
        %1281 = vxpose.xlu0.c.b16.end [8/8] 0, 128
        %v1282 = vpop.trf.xlu0
        %v1283 = vpop.trf.xlu0
        %v1284 = vpop.trf.xlu0
        %v1285 = vpop.trf.xlu0
        %v1286 = vpop.trf.xlu0
        %v1287 = vpop.trf.xlu0
        %v1288 = vpop.trf.xlu0
        %v1289 = vpop.trf.xlu0
        %1290 = vxpose.xlu0.c.b16.start [1/8] %v1248, 128
        %1291 = vxpose.xlu0.c.b16.cont [2/8] 0, 128
        %1292 = vxpose.xlu0.c.b16.cont [3/8] 0, 128
        %1293 = vxpose.xlu0.c.b16.cont [4/8] 0, 128
        %1294 = vxpose.xlu0.c.b16.cont [5/8] 0, 128
        %1295 = vxpose.xlu0.c.b16.cont [6/8] 0, 128
        %1296 = vxpose.xlu0.c.b16.cont [7/8] 0, 128
        %1297 = vxpose.xlu0.c.b16.end [8/8] 0, 128
        %v1298 = vpop.trf.xlu0
        %v1299 = vpop.trf.xlu0
        %v1300 = vpop.trf.xlu0
        %v1301 = vpop.trf.xlu0
        %v1302 = vpop.trf.xlu0
        %v1303 = vpop.trf.xlu0
        %v1304 = vpop.trf.xlu0
        %v1305 = vpop.trf.xlu0
        %1306 = vxpose.xlu0.c.b16.start [1/8] %v1252, 128
        %1307 = vxpose.xlu0.c.b16.cont [2/8] 0, 128
        %1308 = vxpose.xlu0.c.b16.cont [3/8] 0, 128
        %1309 = vxpose.xlu0.c.b16.cont [4/8] 0, 128
        %1310 = vxpose.xlu0.c.b16.cont [5/8] 0, 128
        %1311 = vxpose.xlu0.c.b16.cont [6/8] 0, 128
        %1312 = vxpose.xlu0.c.b16.cont [7/8] 0, 128
        %1313 = vxpose.xlu0.c.b16.end [8/8] 0, 128
        %v1314 = vpop.trf.xlu0
        %v1315 = vpop.trf.xlu0
        %v1316 = vpop.trf.xlu0
        %v1317 = vpop.trf.xlu0
        %v1318 = vpop.trf.xlu0
        %v1319 = vpop.trf.xlu0
        %v1320 = vpop.trf.xlu0
        %v1321 = vpop.trf.xlu0
        %1322 = vxpose.xlu0.c.b16.start [1/8] %v1256, 128
        %1323 = vxpose.xlu0.c.b16.cont [2/8] 0, 128
        %1324 = vxpose.xlu0.c.b16.cont [3/8] 0, 128
        %1325 = vxpose.xlu0.c.b16.cont [4/8] 0, 128
        %1326 = vxpose.xlu0.c.b16.cont [5/8] 0, 128
        %1327 = vxpose.xlu0.c.b16.cont [6/8] 0, 128
        %1328 = vxpose.xlu0.c.b16.cont [7/8] 0, 128
        %1329 = vxpose.xlu0.c.b16.end [8/8] 0, 128
        %v1330 = vpop.trf.xlu0
        %v1331 = vpop.trf.xlu0
        %v1332 = vpop.trf.xlu0
        %v1333 = vpop.trf.xlu0
        %v1334 = vpop.trf.xlu0
        %v1335 = vpop.trf.xlu0
        %v1336 = vpop.trf.xlu0
        %v1337 = vpop.trf.xlu0
        %1338 = vxpose.xlu0.c.b16.start [1/8] %v1260, 128
        %1339 = vxpose.xlu0.c.b16.cont [2/8] 0, 128
        %1340 = vxpose.xlu0.c.b16.cont [3/8] 0, 128
        %1341 = vxpose.xlu0.c.b16.cont [4/8] 0, 128
        %1342 = vxpose.xlu0.c.b16.cont [5/8] 0, 128
        %1343 = vxpose.xlu0.c.b16.cont [6/8] 0, 128
        %1344 = vxpose.xlu0.c.b16.cont [7/8] 0, 128
        %1345 = vxpose.xlu0.c.b16.end [8/8] 0, 128
        %v1346 = vpop.trf.xlu0
        %v1347 = vpop.trf.xlu0
        %v1348 = vpop.trf.xlu0
        %v1349 = vpop.trf.xlu0
        %v1350 = vpop.trf.xlu0
        %v1351 = vpop.trf.xlu0
        %v1352 = vpop.trf.xlu0
        %v1353 = vpop.trf.xlu0
        %1354 = vxpose.xlu0.c.b16.start [1/8] %v1264, 128
        %1355 = vxpose.xlu0.c.b16.cont [2/8] 0, 128
        %1356 = vxpose.xlu0.c.b16.cont [3/8] 0, 128
        %1357 = vxpose.xlu0.c.b16.cont [4/8] 0, 128
        %1358 = vxpose.xlu0.c.b16.cont [5/8] 0, 128
        %1359 = vxpose.xlu0.c.b16.cont [6/8] 0, 128
        %1360 = vxpose.xlu0.c.b16.cont [7/8] 0, 128
        %1361 = vxpose.xlu0.c.b16.end [8/8] 0, 128
        %v1362 = vpop.trf.xlu0
        %v1363 = vpop.trf.xlu0
        %v1364 = vpop.trf.xlu0
        %v1365 = vpop.trf.xlu0
        %v1366 = vpop.trf.xlu0
        %v1367 = vpop.trf.xlu0
        %v1368 = vpop.trf.xlu0
        %v1369 = vpop.trf.xlu0
        %1370 = vxpose.xlu0.c.b16.start [1/8] %v1268, 128
        %1371 = vxpose.xlu0.c.b16.cont [2/8] 0, 128
        %1372 = vxpose.xlu0.c.b16.cont [3/8] 0, 128
        %1373 = vxpose.xlu0.c.b16.cont [4/8] 0, 128
        %1374 = vxpose.xlu0.c.b16.cont [5/8] 0, 128
        %1375 = vxpose.xlu0.c.b16.cont [6/8] 0, 128
        %1376 = vxpose.xlu0.c.b16.cont [7/8] 0, 128
        %1377 = vxpose.xlu0.c.b16.end [8/8] 0, 128
        %v1378 = vpop.trf.xlu0
        %v1379 = vpop.trf.xlu0
        %v1380 = vpop.trf.xlu0
        %v1381 = vpop.trf.xlu0
        %v1382 = vpop.trf.xlu0
        %v1383 = vpop.trf.xlu0
        %v1384 = vpop.trf.xlu0
        %v1385 = vpop.trf.xlu0
        %1386 = vxpose.xlu0.c.b16.start [1/8] %v1272, 128
        %1387 = vxpose.xlu0.c.b16.cont [2/8] 0, 128
        %1388 = vxpose.xlu0.c.b16.cont [3/8] 0, 128
        %1389 = vxpose.xlu0.c.b16.cont [4/8] 0, 128
        %1390 = vxpose.xlu0.c.b16.cont [5/8] 0, 128
        %1391 = vxpose.xlu0.c.b16.cont [6/8] 0, 128
        %1392 = vxpose.xlu0.c.b16.cont [7/8] 0, 128
        %1393 = vxpose.xlu0.c.b16.end [8/8] 0, 128
        %v1394 = vpop.trf.xlu0
        %v1395 = vpop.trf.xlu0
        %v1396 = vpop.trf.xlu0
        %v1397 = vpop.trf.xlu0
        %v1398 = vpop.trf.xlu0
        %v1399 = vpop.trf.xlu0
        %v1400 = vpop.trf.xlu0
        %v1401 = vpop.trf.xlu0
        %v1402 = vcombine.low %v1282, %v1346
        %v1404 = vunpack.c.l.s4 1983009808
        %v1405 = vunpack.c.0.s8 %v1404
        %v1406 = vlaneseq
        %v1407 = vshrl.u32 %v1406, 7
        %v1408 = vsub.s32 %v1405, %v1407
        %v1409 = vrot.slane %v1402, %v1408
        %v1410 = vcombine.low %v1314, %v1378
        %v1412 = vunpack.c.l.s4 1983009808
        %v1413 = vunpack.c.0.s8 %v1412
        %v1414 = vlaneseq
        %v1415 = vshrl.u32 %v1414, 7
        %v1416 = vsub.s32 %v1413, %v1415
        %v1417 = vrot.slane %v1410, %v1416
        %v1418 = vcombine.low %v1409, %v1417
        %v1420 = vunpack.c.l.s4 1934713408
        %v1421 = vunpack.c.0.s8 %v1420
        %v1422 = vlaneseq
        %v1423 = vshrl.u32 %v1422, 7
        %v1424 = vsub.s32 %v1421, %v1423
        %v1425 = vrot.slane %v1418, %v1424
        %v1426 = vcombine.high %v1425, 0
        %v1427 = vcombine.low %v1298, %v1362
        %v1429 = vunpack.c.l.s4 1983009808
        %v1430 = vunpack.c.0.s8 %v1429
        %v1431 = vlaneseq
        %v1432 = vshrl.u32 %v1431, 7
        %v1433 = vsub.s32 %v1430, %v1432
        %v1434 = vrot.slane %v1427, %v1433
        %v1435 = vcombine.low %v1330, %v1394
        %v1437 = vunpack.c.l.s4 1983009808
        %v1438 = vunpack.c.0.s8 %v1437
        %v1439 = vlaneseq
        %v1440 = vshrl.u32 %v1439, 7
        %v1441 = vsub.s32 %v1438, %v1440
        %v1442 = vrot.slane %v1435, %v1441
        %v1443 = vcombine.low %v1434, %v1442
        %v1445 = vunpack.c.l.s4 1934713408
        %v1446 = vunpack.c.0.s8 %v1445
        %v1447 = vlaneseq
        %v1448 = vshrl.u32 %v1447, 7
        %v1449 = vsub.s32 %v1446, %v1448
        %v1450 = vrot.slane %v1443, %v1449
        %v1451 = vcombine.high %v1450, 0
        %v1454 = vpack.i.b16 %v1450, %v1425
        %v1455 = vshrl.u32 %v1425, 16
        %v1456 = vshrl.u32 %v1450, 16
        %v1457 = vpack.i.b16 %v1456, %v1455
        %v1460 = vpack.i.b16 %v1451, %v1426
        %v1461 = vshrl.u32 %v1426, 16
        %v1462 = vshrl.u32 %v1451, 16
        %v1463 = vpack.i.b16 %v1462, %v1461
        %vm1464 = vcmask 64512
        %v1466 = vsel %vm1464, %v1036, 0
        %vm1468 = vcmask 1043456
        %v1470 = vsel %vm1468, %v1454, 0
        %1472 = vmatprep.subr.bf16.mxu0 0
        %1473 = vmatpush1.bf16.msra.mxu0 %v1470
        %1474 = vmatprep.subr.bf16.mxu0 0
        %1475 = vmatpush1.bf16.msra.mxu0 0
        %1476 = vmatprep.subr.bf16.mxu0 0
        %1477 = vmatpush1.bf16.msra.mxu0 0
        %1478 = vmatprep.subr.bf16.mxu0 0
        %1479 = vmatpush1.bf16.msra.mxu0 0
        %1480 = vmatprep.subr.bf16.mxu0 0
        %1481 = vmatpush1.bf16.msra.mxu0 0
        %1482 = vmatprep.subr.bf16.mxu0 0
        %1483 = vmatpush1.bf16.msra.mxu0 0
        %1484 = vmatprep.subr.bf16.mxu0 0
        %1485 = vmatpush1.bf16.msra.mxu0 0
        %1486 = vmatprep.subr.bf16.mxu0 0
        %1487 = vmatpush1.bf16.msra.mxu0 0
        %1488 = vmatprep.subr.bf16.mxu0 0
        %1489 = vmatpush1.bf16.msra.mxu0 0
        %1490 = vmatprep.subr.bf16.mxu0 0
        %1491 = vmatpush1.bf16.msra.mxu0 0
        %1492 = vmatprep.subr.bf16.mxu0 0
        %1493 = vmatpush1.bf16.msra.mxu0 0
        %1494 = vmatprep.subr.bf16.mxu0 0
        %1495 = vmatpush1.bf16.msra.mxu0 0
        %1496 = vmatprep.subr.bf16.mxu0 0
        %1497 = vmatpush1.bf16.msra.mxu0 0
        %1498 = vmatprep.subr.bf16.mxu0 0
        %1499 = vmatpush1.bf16.msra.mxu0 0
        %1500 = vmatprep.subr.bf16.mxu0 0
        %1501 = vmatpush1.bf16.msra.mxu0 0
        %1502 = vmatprep.subr.bf16.mxu0 0
        %1503 = vmatpush1.bf16.msra.mxu0 0
        %1504 = vmatprep.mubr.bf16.mxu0 0
        %1505 = vmatmul.mubr.bf16.gmra.mrb[0].mxu0 %v1466
        %v1506 = vpop.f32.mrb[0].mxu0
        %v1507 = vadd.f32 %v652, %v1506
        %v1508 = vpop.f32.mrb[0].mxu0
        %v1509 = vpop.f32.mrb[0].mxu0
        %v1510 = vpop.f32.mrb[0].mxu0
        %1511 = vdwg.mxu0
        %v1513 = vsel %vm1464, %v1039, 0
        %v1516 = vsel %vm1468, %v1457, 0
        %1518 = vmatprep.subr.bf16.mxu0 0
        %1519 = vmatpush1.bf16.msra.mxu0 %v1516
        %1520 = vmatprep.subr.bf16.mxu0 0
        %1521 = vmatpush1.bf16.msra.mxu0 0
        %1522 = vmatprep.subr.bf16.mxu0 0
        %1523 = vmatpush1.bf16.msra.mxu0 0
        %1524 = vmatprep.subr.bf16.mxu0 0
        %1525 = vmatpush1.bf16.msra.mxu0 0
        %1526 = vmatprep.subr.bf16.mxu0 0
        %1527 = vmatpush1.bf16.msra.mxu0 0
        %1528 = vmatprep.subr.bf16.mxu0 0
        %1529 = vmatpush1.bf16.msra.mxu0 0
        %1530 = vmatprep.subr.bf16.mxu0 0
        %1531 = vmatpush1.bf16.msra.mxu0 0
        %1532 = vmatprep.subr.bf16.mxu0 0
        %1533 = vmatpush1.bf16.msra.mxu0 0
        %1534 = vmatprep.subr.bf16.mxu0 0
        %1535 = vmatpush1.bf16.msra.mxu0 0
        %1536 = vmatprep.subr.bf16.mxu0 0
        %1537 = vmatpush1.bf16.msra.mxu0 0
        %1538 = vmatprep.subr.bf16.mxu0 0
        %1539 = vmatpush1.bf16.msra.mxu0 0
        %1540 = vmatprep.subr.bf16.mxu0 0
        %1541 = vmatpush1.bf16.msra.mxu0 0
        %1542 = vmatprep.subr.bf16.mxu0 0
        %1543 = vmatpush1.bf16.msra.mxu0 0
        %1544 = vmatprep.subr.bf16.mxu0 0
        %1545 = vmatpush1.bf16.msra.mxu0 0
        %1546 = vmatprep.subr.bf16.mxu0 0
        %1547 = vmatpush1.bf16.msra.mxu0 0
        %1548 = vmatprep.subr.bf16.mxu0 0
        %1549 = vmatpush1.bf16.msra.mxu0 0
        %1550 = vmatprep.mubr.bf16.mxu0 0
        %1551 = vmatmul.mubr.bf16.gmra.mrb[0].mxu0 %v1513
        %v1552 = vpop.f32.mrb[0].mxu0
        %v1553 = vadd.f32 %v652, %v1552
        %v1554 = vpop.f32.mrb[0].mxu0
        %v1555 = vpop.f32.mrb[0].mxu0
        %v1556 = vpop.f32.mrb[0].mxu0
        %1557 = vdwg.mxu0
        %v1559 = vsel %vm1464, %v1042, 0
        %v1562 = vsel %vm1468, %v1460, 0
        %1564 = vmatprep.subr.bf16.mxu0 0
        %1565 = vmatpush1.bf16.msra.mxu0 %v1562
        %1566 = vmatprep.subr.bf16.mxu0 0
        %1567 = vmatpush1.bf16.msra.mxu0 0
        %1568 = vmatprep.subr.bf16.mxu0 0
        %1569 = vmatpush1.bf16.msra.mxu0 0
        %1570 = vmatprep.subr.bf16.mxu0 0
        %1571 = vmatpush1.bf16.msra.mxu0 0
        %1572 = vmatprep.subr.bf16.mxu0 0
        %1573 = vmatpush1.bf16.msra.mxu0 0
        %1574 = vmatprep.subr.bf16.mxu0 0
        %1575 = vmatpush1.bf16.msra.mxu0 0
        %1576 = vmatprep.subr.bf16.mxu0 0
        %1577 = vmatpush1.bf16.msra.mxu0 0
        %1578 = vmatprep.subr.bf16.mxu0 0
        %1579 = vmatpush1.bf16.msra.mxu0 0
        %1580 = vmatprep.subr.bf16.mxu0 0
        %1581 = vmatpush1.bf16.msra.mxu0 0
        %1582 = vmatprep.subr.bf16.mxu0 0
        %1583 = vmatpush1.bf16.msra.mxu0 0
        %1584 = vmatprep.subr.bf16.mxu0 0
        %1585 = vmatpush1.bf16.msra.mxu0 0
        %1586 = vmatprep.subr.bf16.mxu0 0
        %1587 = vmatpush1.bf16.msra.mxu0 0
        %1588 = vmatprep.subr.bf16.mxu0 0
        %1589 = vmatpush1.bf16.msra.mxu0 0
        %1590 = vmatprep.subr.bf16.mxu0 0
        %1591 = vmatpush1.bf16.msra.mxu0 0
        %1592 = vmatprep.subr.bf16.mxu0 0
        %1593 = vmatpush1.bf16.msra.mxu0 0
        %1594 = vmatprep.subr.bf16.mxu0 0
        %1595 = vmatpush1.bf16.msra.mxu0 0
        %1596 = vmatprep.mubr.bf16.mxu0 0
        %1597 = vmatmul.mubr.bf16.gmra.mrb[0].mxu0 %v1559
        %v1598 = vpop.f32.mrb[0].mxu0
        %v1599 = vadd.f32 %v652, %v1598
        %v1600 = vpop.f32.mrb[0].mxu0
        %v1601 = vpop.f32.mrb[0].mxu0
        %v1602 = vpop.f32.mrb[0].mxu0
        %1603 = vdwg.mxu0
        %v1605 = vsel %vm1464, %v1045, 0
        %v1608 = vsel %vm1468, %v1463, 0
        %1610 = vmatprep.subr.bf16.mxu0 0
        %1611 = vmatpush1.bf16.msra.mxu0 %v1608
        %1612 = vmatprep.subr.bf16.mxu0 0
        %1613 = vmatpush1.bf16.msra.mxu0 0
        %1614 = vmatprep.subr.bf16.mxu0 0
        %1615 = vmatpush1.bf16.msra.mxu0 0
        %1616 = vmatprep.subr.bf16.mxu0 0
        %1617 = vmatpush1.bf16.msra.mxu0 0
        %1618 = vmatprep.subr.bf16.mxu0 0
        %1619 = vmatpush1.bf16.msra.mxu0 0
        %1620 = vmatprep.subr.bf16.mxu0 0
        %1621 = vmatpush1.bf16.msra.mxu0 0
        %1622 = vmatprep.subr.bf16.mxu0 0
        %1623 = vmatpush1.bf16.msra.mxu0 0
        %1624 = vmatprep.subr.bf16.mxu0 0
        %1625 = vmatpush1.bf16.msra.mxu0 0
        %1626 = vmatprep.subr.bf16.mxu0 0
        %1627 = vmatpush1.bf16.msra.mxu0 0
        %1628 = vmatprep.subr.bf16.mxu0 0
        %1629 = vmatpush1.bf16.msra.mxu0 0
        %1630 = vmatprep.subr.bf16.mxu0 0
        %1631 = vmatpush1.bf16.msra.mxu0 0
        %1632 = vmatprep.subr.bf16.mxu0 0
        %1633 = vmatpush1.bf16.msra.mxu0 0
        %1634 = vmatprep.subr.bf16.mxu0 0
        %1635 = vmatpush1.bf16.msra.mxu0 0
        %1636 = vmatprep.subr.bf16.mxu0 0
        %1637 = vmatpush1.bf16.msra.mxu0 0
        %1638 = vmatprep.subr.bf16.mxu0 0
        %1639 = vmatpush1.bf16.msra.mxu0 0
        %1640 = vmatprep.subr.bf16.mxu0 0
        %1641 = vmatpush1.bf16.msra.mxu0 0
        %1642 = vmatprep.mubr.bf16.mxu0 0
        %1643 = vmatmul.mubr.bf16.gmra.mrb[0].mxu0 %v1605
        %v1644 = vpop.f32.mrb[0].mxu0
        %v1645 = vadd.f32 %v652, %v1644
        %v1646 = vpop.f32.mrb[0].mxu0
        %v1647 = vpop.f32.mrb[0].mxu0
        %v1648 = vpop.f32.mrb[0].mxu0
        %1649 = vdwg.mxu0
        %v1650 = vsel %vm1464, %v1507, -inf
        %1651 = vmax.xlane.f32.xlu0 %v1650
        %v1652 = vpop.xlane.xlu0 %1651
        %v1653 = vsel %vm1464, %v1553, -inf
        %1654 = vmax.xlane.f32.xlu0 %v1653
        %v1655 = vpop.xlane.xlu0 %1654
        %v1656 = vsel %vm1464, %v1599, -inf
        %1657 = vmax.xlane.f32.xlu0 %v1656
        %v1658 = vpop.xlane.xlu0 %1657
        %v1659 = vsel %vm1464, %v1645, -inf
        %1660 = vmax.xlane.f32.xlu0 %v1659
        %v1661 = vpop.xlane.xlu0 %1660
        %v1662 = vsub.f32 %v1507, %v1652
        %v1663 = vsub.f32 %v1553, %v1655
        %v1664 = vsub.f32 %v1599, %v1658
        %v1665 = vsub.f32 %v1645, %v1661
        %v1666 = vmul.f32 %v1662, 1.442695
        %v1667 = vpow.pop %v1666
        %v1668 = vmul.f32 %v1663, 1.442695
        %v1669 = vpow.pop %v1668
        %v1670 = vmul.f32 %v1664, 1.442695
        %v1671 = vpow.pop %v1670
        %v1672 = vmul.f32 %v1665, 1.442695
        %v1673 = vpow.pop %v1672
        %v1674 = vsel %vm1464, %v1667, 0.0
        %1675 = vadd.xlane.f32.xlu0 %v1674
        %v1676 = vpop.xlane.xlu0 %1675
        %v1677 = vsel %vm1464, %v1669, 0.0
        %1678 = vadd.xlane.f32.xlu0 %v1677
        %v1679 = vpop.xlane.xlu0 %1678
        %v1680 = vsel %vm1464, %v1671, 0.0
        %1681 = vadd.xlane.f32.xlu0 %v1680
        %v1682 = vpop.xlane.xlu0 %1681
        %v1683 = vsel %vm1464, %v1673, 0.0
        %1684 = vadd.xlane.f32.xlu0 %v1683
        %v1685 = vpop.xlane.xlu0 %1684
        %v1686 = vrcp.pop %v1676
        %v1687 = vmul.f32 %v1667, %v1686
        %v1688 = vrcp.pop %v1679
        %v1689 = vmul.f32 %v1669, %v1688
        %v1690 = vrcp.pop %v1682
        %v1691 = vmul.f32 %v1671, %v1690
        %v1692 = vrcp.pop %v1685
        %v1693 = vmul.f32 %v1673, %v1692
        %v1694 = vpack.c.bf16 %v1687, %v1687
        %v1695 = vpack.c.bf16 %v1689, %v1689
        %v1696 = vpack.c.bf16 %v1691, %v1691
        %v1697 = vpack.c.bf16 %v1693, %v1693
        %1698 = vxpose.xlu0.c.b16.start [1/8] %v976, 128
        %1699 = vxpose.xlu0.c.b16.cont [2/8] 0, 128
        %1700 = vxpose.xlu0.c.b16.cont [3/8] 0, 128
        %1701 = vxpose.xlu0.c.b16.cont [4/8] 0, 128
        %1702 = vxpose.xlu0.c.b16.cont [5/8] 0, 128
        %1703 = vxpose.xlu0.c.b16.cont [6/8] 0, 128
        %1704 = vxpose.xlu0.c.b16.cont [7/8] 0, 128
        %1705 = vxpose.xlu0.c.b16.end [8/8] 0, 128
        %v1706 = vpop.trf.xlu0
        %v1707 = vpop.trf.xlu0
        %v1708 = vpop.trf.xlu0
        %v1709 = vpop.trf.xlu0
        %v1710 = vpop.trf.xlu0
        %v1711 = vpop.trf.xlu0
        %v1712 = vpop.trf.xlu0
        %v1713 = vpop.trf.xlu0
        %1714 = vxpose.xlu0.c.b16.start [1/8] %v977, 128
        %1715 = vxpose.xlu0.c.b16.cont [2/8] 0, 128
        %1716 = vxpose.xlu0.c.b16.cont [3/8] 0, 128
        %1717 = vxpose.xlu0.c.b16.cont [4/8] 0, 128
        %1718 = vxpose.xlu0.c.b16.cont [5/8] 0, 128
        %1719 = vxpose.xlu0.c.b16.cont [6/8] 0, 128
        %1720 = vxpose.xlu0.c.b16.cont [7/8] 0, 128
        %1721 = vxpose.xlu0.c.b16.end [8/8] 0, 128
        %v1722 = vpop.trf.xlu0
        %v1723 = vpop.trf.xlu0
        %v1724 = vpop.trf.xlu0
        %v1725 = vpop.trf.xlu0
        %v1726 = vpop.trf.xlu0
        %v1727 = vpop.trf.xlu0
        %v1728 = vpop.trf.xlu0
        %v1729 = vpop.trf.xlu0
        %1730 = vxpose.xlu0.c.b16.start [1/8] %v978, 128
        %1731 = vxpose.xlu0.c.b16.cont [2/8] 0, 128
        %1732 = vxpose.xlu0.c.b16.cont [3/8] 0, 128
        %1733 = vxpose.xlu0.c.b16.cont [4/8] 0, 128
        %1734 = vxpose.xlu0.c.b16.cont [5/8] 0, 128
        %1735 = vxpose.xlu0.c.b16.cont [6/8] 0, 128
        %1736 = vxpose.xlu0.c.b16.cont [7/8] 0, 128
        %1737 = vxpose.xlu0.c.b16.end [8/8] 0, 128
        %v1738 = vpop.trf.xlu0
        %v1739 = vpop.trf.xlu0
        %v1740 = vpop.trf.xlu0
        %v1741 = vpop.trf.xlu0
        %v1742 = vpop.trf.xlu0
        %v1743 = vpop.trf.xlu0
        %v1744 = vpop.trf.xlu0
        %v1745 = vpop.trf.xlu0
        %1746 = vxpose.xlu0.c.b16.start [1/8] %v979, 128
        %1747 = vxpose.xlu0.c.b16.cont [2/8] 0, 128
        %1748 = vxpose.xlu0.c.b16.cont [3/8] 0, 128
        %1749 = vxpose.xlu0.c.b16.cont [4/8] 0, 128
        %1750 = vxpose.xlu0.c.b16.cont [5/8] 0, 128
        %1751 = vxpose.xlu0.c.b16.cont [6/8] 0, 128
        %1752 = vxpose.xlu0.c.b16.cont [7/8] 0, 128
        %1753 = vxpose.xlu0.c.b16.end [8/8] 0, 128
        %v1754 = vpop.trf.xlu0
        %v1755 = vpop.trf.xlu0
        %v1756 = vpop.trf.xlu0
        %v1757 = vpop.trf.xlu0
        %v1758 = vpop.trf.xlu0
        %v1759 = vpop.trf.xlu0
        %v1760 = vpop.trf.xlu0
        %v1761 = vpop.trf.xlu0
        %1762 = vxpose.xlu0.c.b16.start [1/8] %v980, 128
        %1763 = vxpose.xlu0.c.b16.cont [2/8] 0, 128
        %1764 = vxpose.xlu0.c.b16.cont [3/8] 0, 128
        %1765 = vxpose.xlu0.c.b16.cont [4/8] 0, 128
        %1766 = vxpose.xlu0.c.b16.cont [5/8] 0, 128
        %1767 = vxpose.xlu0.c.b16.cont [6/8] 0, 128
        %1768 = vxpose.xlu0.c.b16.cont [7/8] 0, 128
        %1769 = vxpose.xlu0.c.b16.end [8/8] 0, 128
        %v1770 = vpop.trf.xlu0
        %v1771 = vpop.trf.xlu0
        %v1772 = vpop.trf.xlu0
        %v1773 = vpop.trf.xlu0
        %v1774 = vpop.trf.xlu0
        %v1775 = vpop.trf.xlu0
        %v1776 = vpop.trf.xlu0
        %v1777 = vpop.trf.xlu0
        %1778 = vxpose.xlu0.c.b16.start [1/8] %v981, 128
        %1779 = vxpose.xlu0.c.b16.cont [2/8] 0, 128
        %1780 = vxpose.xlu0.c.b16.cont [3/8] 0, 128
        %1781 = vxpose.xlu0.c.b16.cont [4/8] 0, 128
        %1782 = vxpose.xlu0.c.b16.cont [5/8] 0, 128
        %1783 = vxpose.xlu0.c.b16.cont [6/8] 0, 128
        %1784 = vxpose.xlu0.c.b16.cont [7/8] 0, 128
        %1785 = vxpose.xlu0.c.b16.end [8/8] 0, 128
        %v1786 = vpop.trf.xlu0
        %v1787 = vpop.trf.xlu0
        %v1788 = vpop.trf.xlu0
        %v1789 = vpop.trf.xlu0
        %v1790 = vpop.trf.xlu0
        %v1791 = vpop.trf.xlu0
        %v1792 = vpop.trf.xlu0
        %v1793 = vpop.trf.xlu0
        %1794 = vxpose.xlu0.c.b16.start [1/8] %v982, 128
        %1795 = vxpose.xlu0.c.b16.cont [2/8] 0, 128
        %1796 = vxpose.xlu0.c.b16.cont [3/8] 0, 128
        %1797 = vxpose.xlu0.c.b16.cont [4/8] 0, 128
        %1798 = vxpose.xlu0.c.b16.cont [5/8] 0, 128
        %1799 = vxpose.xlu0.c.b16.cont [6/8] 0, 128
        %1800 = vxpose.xlu0.c.b16.cont [7/8] 0, 128
        %1801 = vxpose.xlu0.c.b16.end [8/8] 0, 128
        %v1802 = vpop.trf.xlu0
        %v1803 = vpop.trf.xlu0
        %v1804 = vpop.trf.xlu0
        %v1805 = vpop.trf.xlu0
        %v1806 = vpop.trf.xlu0
        %v1807 = vpop.trf.xlu0
        %v1808 = vpop.trf.xlu0
        %v1809 = vpop.trf.xlu0
        %1810 = vxpose.xlu0.c.b16.start [1/8] %v983, 128
        %1811 = vxpose.xlu0.c.b16.cont [2/8] 0, 128
        %1812 = vxpose.xlu0.c.b16.cont [3/8] 0, 128
        %1813 = vxpose.xlu0.c.b16.cont [4/8] 0, 128
        %1814 = vxpose.xlu0.c.b16.cont [5/8] 0, 128
        %1815 = vxpose.xlu0.c.b16.cont [6/8] 0, 128
        %1816 = vxpose.xlu0.c.b16.cont [7/8] 0, 128
        %1817 = vxpose.xlu0.c.b16.end [8/8] 0, 128
        %v1818 = vpop.trf.xlu0
        %v1819 = vpop.trf.xlu0
        %v1820 = vpop.trf.xlu0
        %v1821 = vpop.trf.xlu0
        %v1822 = vpop.trf.xlu0
        %v1823 = vpop.trf.xlu0
        %v1824 = vpop.trf.xlu0
        %v1825 = vpop.trf.xlu0
        %v1826 = vcombine.low %v1706, %v1770
        %v1828 = vunpack.c.l.s4 1983009808
        %v1829 = vunpack.c.0.s8 %v1828
        %v1830 = vlaneseq
        %v1831 = vshrl.u32 %v1830, 7
        %v1832 = vsub.s32 %v1829, %v1831
        %v1833 = vrot.slane %v1826, %v1832
        %v1834 = vcombine.low %v1738, %v1802
        %v1836 = vunpack.c.l.s4 1983009808
        %v1837 = vunpack.c.0.s8 %v1836
        %v1838 = vlaneseq
        %v1839 = vshrl.u32 %v1838, 7
        %v1840 = vsub.s32 %v1837, %v1839
        %v1841 = vrot.slane %v1834, %v1840
        %v1842 = vcombine.low %v1833, %v1841
        %v1843 = vcombine.high %v1833, %v1841
        %v1845 = vunpack.c.l.s4 1934713408
        %v1846 = vunpack.c.0.s8 %v1845
        %v1847 = vlaneseq
        %v1848 = vshrl.u32 %v1847, 7
        %v1849 = vsub.s32 %v1846, %v1848
        %v1850 = vrot.slane %v1842, %v1849
        %v1852 = vunpack.c.l.s4 1934713408
        %v1853 = vunpack.c.0.s8 %v1852
        %v1854 = vlaneseq
        %v1855 = vshrl.u32 %v1854, 7
        %v1856 = vsub.s32 %v1853, %v1855
        %v1857 = vrot.slane %v1843, %v1856
        %v1858 = vcombine.high %v1850, 0
        %v1859 = vcombine.high %v1857, 0
        %v1860 = vcombine.low %v1722, %v1786
        %v1862 = vunpack.c.l.s4 1983009808
        %v1863 = vunpack.c.0.s8 %v1862
        %v1864 = vlaneseq
        %v1865 = vshrl.u32 %v1864, 7
        %v1866 = vsub.s32 %v1863, %v1865
        %v1867 = vrot.slane %v1860, %v1866
        %v1868 = vcombine.low %v1754, %v1818
        %v1870 = vunpack.c.l.s4 1983009808
        %v1871 = vunpack.c.0.s8 %v1870
        %v1872 = vlaneseq
        %v1873 = vshrl.u32 %v1872, 7
        %v1874 = vsub.s32 %v1871, %v1873
        %v1875 = vrot.slane %v1868, %v1874
        %v1876 = vcombine.low %v1867, %v1875
        %v1877 = vcombine.high %v1867, %v1875
        %v1879 = vunpack.c.l.s4 1934713408
        %v1880 = vunpack.c.0.s8 %v1879
        %v1881 = vlaneseq
        %v1882 = vshrl.u32 %v1881, 7
        %v1883 = vsub.s32 %v1880, %v1882
        %v1884 = vrot.slane %v1876, %v1883
        %v1886 = vunpack.c.l.s4 1934713408
        %v1887 = vunpack.c.0.s8 %v1886
        %v1888 = vlaneseq
        %v1889 = vshrl.u32 %v1888, 7
        %v1890 = vsub.s32 %v1887, %v1889
        %v1891 = vrot.slane %v1877, %v1890
        %v1892 = vcombine.high %v1884, 0
        %v1893 = vcombine.high %v1891, 0
        %v1896 = vpack.i.b16 %v1884, %v1850
        %v1898 = vshrl.u32 %v1850, 16
        %v1899 = vshrl.u32 %v1884, 16
        %v1900 = vpack.i.b16 %v1899, %v1898
        %v1904 = vpack.i.b16 %v1892, %v1858
        %v1906 = vshrl.u32 %v1858, 16
        %v1907 = vshrl.u32 %v1892, 16
        %v1908 = vpack.i.b16 %v1907, %v1906
        %v1912 = vpack.i.b16 %v1891, %v1857
        %v1914 = vshrl.u32 %v1857, 16
        %v1915 = vshrl.u32 %v1891, 16
        %v1916 = vpack.i.b16 %v1915, %v1914
        %v1920 = vpack.i.b16 %v1893, %v1859
        %v1922 = vshrl.u32 %v1859, 16
        %v1923 = vshrl.u32 %v1893, 16
        %v1924 = vpack.i.b16 %v1923, %v1922
        %1926 = vxpose.xlu0.c.b16.start [1/8] %v1896, 128
        %1927 = vxpose.xlu0.c.b16.cont [2/8] 0, 128
        %1928 = vxpose.xlu0.c.b16.cont [3/8] 0, 128
        %1929 = vxpose.xlu0.c.b16.cont [4/8] 0, 128
        %1930 = vxpose.xlu0.c.b16.cont [5/8] 0, 128
        %1931 = vxpose.xlu0.c.b16.cont [6/8] 0, 128
        %1932 = vxpose.xlu0.c.b16.cont [7/8] 0, 128
        %1933 = vxpose.xlu0.c.b16.end [8/8] 0, 128
        %v1934 = vpop.trf.xlu0
        %v1935 = vpop.trf.xlu0
        %v1936 = vpop.trf.xlu0
        %v1937 = vpop.trf.xlu0
        %v1938 = vpop.trf.xlu0
        %v1939 = vpop.trf.xlu0
        %v1940 = vpop.trf.xlu0
        %v1941 = vpop.trf.xlu0
        %1942 = vxpose.xlu0.c.b16.start [1/8] %v1900, 128
        %1943 = vxpose.xlu0.c.b16.cont [2/8] 0, 128
        %1944 = vxpose.xlu0.c.b16.cont [3/8] 0, 128
        %1945 = vxpose.xlu0.c.b16.cont [4/8] 0, 128
        %1946 = vxpose.xlu0.c.b16.cont [5/8] 0, 128
        %1947 = vxpose.xlu0.c.b16.cont [6/8] 0, 128
        %1948 = vxpose.xlu0.c.b16.cont [7/8] 0, 128
        %1949 = vxpose.xlu0.c.b16.end [8/8] 0, 128
        %v1950 = vpop.trf.xlu0
        %v1951 = vpop.trf.xlu0
        %v1952 = vpop.trf.xlu0
        %v1953 = vpop.trf.xlu0
        %v1954 = vpop.trf.xlu0
        %v1955 = vpop.trf.xlu0
        %v1956 = vpop.trf.xlu0
        %v1957 = vpop.trf.xlu0
        %1958 = vxpose.xlu0.c.b16.start [1/8] %v1904, 128
        %1959 = vxpose.xlu0.c.b16.cont [2/8] 0, 128
        %1960 = vxpose.xlu0.c.b16.cont [3/8] 0, 128
        %1961 = vxpose.xlu0.c.b16.cont [4/8] 0, 128
        %1962 = vxpose.xlu0.c.b16.cont [5/8] 0, 128
        %1963 = vxpose.xlu0.c.b16.cont [6/8] 0, 128
        %1964 = vxpose.xlu0.c.b16.cont [7/8] 0, 128
        %1965 = vxpose.xlu0.c.b16.end [8/8] 0, 128
        %v1966 = vpop.trf.xlu0
        %v1967 = vpop.trf.xlu0
        %v1968 = vpop.trf.xlu0
        %v1969 = vpop.trf.xlu0
        %v1970 = vpop.trf.xlu0
        %v1971 = vpop.trf.xlu0
        %v1972 = vpop.trf.xlu0
        %v1973 = vpop.trf.xlu0
        %1974 = vxpose.xlu0.c.b16.start [1/8] %v1908, 128
        %1975 = vxpose.xlu0.c.b16.cont [2/8] 0, 128
        %1976 = vxpose.xlu0.c.b16.cont [3/8] 0, 128
        %1977 = vxpose.xlu0.c.b16.cont [4/8] 0, 128
        %1978 = vxpose.xlu0.c.b16.cont [5/8] 0, 128
        %1979 = vxpose.xlu0.c.b16.cont [6/8] 0, 128
        %1980 = vxpose.xlu0.c.b16.cont [7/8] 0, 128
        %1981 = vxpose.xlu0.c.b16.end [8/8] 0, 128
        %v1982 = vpop.trf.xlu0
        %v1983 = vpop.trf.xlu0
        %v1984 = vpop.trf.xlu0
        %v1985 = vpop.trf.xlu0
        %v1986 = vpop.trf.xlu0
        %v1987 = vpop.trf.xlu0
        %v1988 = vpop.trf.xlu0
        %v1989 = vpop.trf.xlu0
        %1990 = vxpose.xlu0.c.b16.start [1/8] %v1912, 128
        %1991 = vxpose.xlu0.c.b16.cont [2/8] 0, 128
        %1992 = vxpose.xlu0.c.b16.cont [3/8] 0, 128
        %1993 = vxpose.xlu0.c.b16.cont [4/8] 0, 128
        %1994 = vxpose.xlu0.c.b16.cont [5/8] 0, 128
        %1995 = vxpose.xlu0.c.b16.cont [6/8] 0, 128
        %1996 = vxpose.xlu0.c.b16.cont [7/8] 0, 128
        %1997 = vxpose.xlu0.c.b16.end [8/8] 0, 128
        %v1998 = vpop.trf.xlu0
        %v1999 = vpop.trf.xlu0
        %v2000 = vpop.trf.xlu0
        %v2001 = vpop.trf.xlu0
        %v2002 = vpop.trf.xlu0
        %v2003 = vpop.trf.xlu0
        %v2004 = vpop.trf.xlu0
        %v2005 = vpop.trf.xlu0
        %2006 = vxpose.xlu0.c.b16.start [1/8] %v1916, 128
        %2007 = vxpose.xlu0.c.b16.cont [2/8] 0, 128
        %2008 = vxpose.xlu0.c.b16.cont [3/8] 0, 128
        %2009 = vxpose.xlu0.c.b16.cont [4/8] 0, 128
        %2010 = vxpose.xlu0.c.b16.cont [5/8] 0, 128
        %2011 = vxpose.xlu0.c.b16.cont [6/8] 0, 128
        %2012 = vxpose.xlu0.c.b16.cont [7/8] 0, 128
        %2013 = vxpose.xlu0.c.b16.end [8/8] 0, 128
        %v2014 = vpop.trf.xlu0
        %v2015 = vpop.trf.xlu0
        %v2016 = vpop.trf.xlu0
        %v2017 = vpop.trf.xlu0
        %v2018 = vpop.trf.xlu0
        %v2019 = vpop.trf.xlu0
        %v2020 = vpop.trf.xlu0
        %v2021 = vpop.trf.xlu0
        %2022 = vxpose.xlu0.c.b16.start [1/8] %v1920, 128
        %2023 = vxpose.xlu0.c.b16.cont [2/8] 0, 128
        %2024 = vxpose.xlu0.c.b16.cont [3/8] 0, 128
        %2025 = vxpose.xlu0.c.b16.cont [4/8] 0, 128
        %2026 = vxpose.xlu0.c.b16.cont [5/8] 0, 128
        %2027 = vxpose.xlu0.c.b16.cont [6/8] 0, 128
        %2028 = vxpose.xlu0.c.b16.cont [7/8] 0, 128
        %2029 = vxpose.xlu0.c.b16.end [8/8] 0, 128
        %v2030 = vpop.trf.xlu0
        %v2031 = vpop.trf.xlu0
        %v2032 = vpop.trf.xlu0
        %v2033 = vpop.trf.xlu0
        %v2034 = vpop.trf.xlu0
        %v2035 = vpop.trf.xlu0
        %v2036 = vpop.trf.xlu0
        %v2037 = vpop.trf.xlu0
        %2038 = vxpose.xlu0.c.b16.start [1/8] %v1924, 128
        %2039 = vxpose.xlu0.c.b16.cont [2/8] 0, 128
        %2040 = vxpose.xlu0.c.b16.cont [3/8] 0, 128
        %2041 = vxpose.xlu0.c.b16.cont [4/8] 0, 128
        %2042 = vxpose.xlu0.c.b16.cont [5/8] 0, 128
        %2043 = vxpose.xlu0.c.b16.cont [6/8] 0, 128
        %2044 = vxpose.xlu0.c.b16.cont [7/8] 0, 128
        %2045 = vxpose.xlu0.c.b16.end [8/8] 0, 128
        %v2046 = vpop.trf.xlu0
        %v2047 = vpop.trf.xlu0
        %v2048 = vpop.trf.xlu0
        %v2049 = vpop.trf.xlu0
        %v2050 = vpop.trf.xlu0
        %v2051 = vpop.trf.xlu0
        %v2052 = vpop.trf.xlu0
        %v2053 = vpop.trf.xlu0
        %v2054 = vcombine.low %v1934, %v1998
        %v2056 = vunpack.c.l.s4 1983009808
        %v2057 = vunpack.c.0.s8 %v2056
        %v2058 = vlaneseq
        %v2059 = vshrl.u32 %v2058, 7
        %v2060 = vsub.s32 %v2057, %v2059
        %v2061 = vrot.slane %v2054, %v2060
        %v2062 = vcombine.low %v1966, %v2030
        %v2064 = vunpack.c.l.s4 1983009808
        %v2065 = vunpack.c.0.s8 %v2064
        %v2066 = vlaneseq
        %v2067 = vshrl.u32 %v2066, 7
        %v2068 = vsub.s32 %v2065, %v2067
        %v2069 = vrot.slane %v2062, %v2068
        %v2070 = vcombine.low %v2061, %v2069
        %v2072 = vunpack.c.l.s4 1934713408
        %v2073 = vunpack.c.0.s8 %v2072
        %v2074 = vlaneseq
        %v2075 = vshrl.u32 %v2074, 7
        %v2076 = vsub.s32 %v2073, %v2075
        %v2077 = vrot.slane %v2070, %v2076
        %v2078 = vcombine.high %v2077, 0
        %v2079 = vcombine.low %v1950, %v2014
        %v2081 = vunpack.c.l.s4 1983009808
        %v2082 = vunpack.c.0.s8 %v2081
        %v2083 = vlaneseq
        %v2084 = vshrl.u32 %v2083, 7
        %v2085 = vsub.s32 %v2082, %v2084
        %v2086 = vrot.slane %v2079, %v2085
        %v2087 = vcombine.low %v1982, %v2046
        %v2089 = vunpack.c.l.s4 1983009808
        %v2090 = vunpack.c.0.s8 %v2089
        %v2091 = vlaneseq
        %v2092 = vshrl.u32 %v2091, 7
        %v2093 = vsub.s32 %v2090, %v2092
        %v2094 = vrot.slane %v2087, %v2093
        %v2095 = vcombine.low %v2086, %v2094
        %v2097 = vunpack.c.l.s4 1934713408
        %v2098 = vunpack.c.0.s8 %v2097
        %v2099 = vlaneseq
        %v2100 = vshrl.u32 %v2099, 7
        %v2101 = vsub.s32 %v2098, %v2100
        %v2102 = vrot.slane %v2095, %v2101
        %v2103 = vcombine.high %v2102, 0
        %v2106 = vpack.i.b16 %v2102, %v2077
        %v2107 = vshrl.u32 %v2077, 16
        %v2108 = vshrl.u32 %v2102, 16
        %v2109 = vpack.i.b16 %v2108, %v2107
        %v2112 = vpack.i.b16 %v2103, %v2078
        %v2113 = vshrl.u32 %v2078, 16
        %v2114 = vshrl.u32 %v2103, 16
        %v2115 = vpack.i.b16 %v2114, %v2113
        %v2117 = vsel %vm1464, %v2106, 0
        %v2120 = vsel %vm1464, %v1694, 0
        %2122 = vmatprep.subr.bf16.mxu0 0
        %2123 = vmatpush1.bf16.xpose.msra.mxu0 %v2120
        %2124 = vmatprep.subr.bf16.mxu0 0
        %2125 = vmatpush1.bf16.xpose.msra.mxu0 0
        %2126 = vmatprep.subr.bf16.mxu0 0
        %2127 = vmatpush1.bf16.xpose.msra.mxu0 0
        %2128 = vmatprep.subr.bf16.mxu0 0
        %2129 = vmatpush1.bf16.xpose.msra.mxu0 0
        %2130 = vmatprep.subr.bf16.mxu0 0
        %2131 = vmatpush1.bf16.xpose.msra.mxu0 0
        %2132 = vmatprep.subr.bf16.mxu0 0
        %2133 = vmatpush1.bf16.xpose.msra.mxu0 0
        %2134 = vmatprep.subr.bf16.mxu0 0
        %2135 = vmatpush1.bf16.xpose.msra.mxu0 0
        %2136 = vmatprep.subr.bf16.mxu0 0
        %2137 = vmatpush1.bf16.xpose.msra.mxu0 0
        %2138 = vmatprep.subr.bf16.mxu0 0
        %2139 = vmatpush1.bf16.xpose.msra.mxu0 0
        %2140 = vmatprep.subr.bf16.mxu0 0
        %2141 = vmatpush1.bf16.xpose.msra.mxu0 0
        %2142 = vmatprep.subr.bf16.mxu0 0
        %2143 = vmatpush1.bf16.xpose.msra.mxu0 0
        %2144 = vmatprep.subr.bf16.mxu0 0
        %2145 = vmatpush1.bf16.xpose.msra.mxu0 0
        %2146 = vmatprep.subr.bf16.mxu0 0
        %2147 = vmatpush1.bf16.xpose.msra.mxu0 0
        %2148 = vmatprep.subr.bf16.mxu0 0
        %2149 = vmatpush1.bf16.xpose.msra.mxu0 0
        %2150 = vmatprep.subr.bf16.mxu0 0
        %2151 = vmatpush1.bf16.xpose.msra.mxu0 0
        %2152 = vmatprep.subr.bf16.mxu0 0
        %2153 = vmatpush1.bf16.xpose.msra.mxu0 0
        %2154 = vmatprep.mubr.bf16.mxu0 0
        %2155 = vmatmul.mubr.bf16.gmra.mrb[0].mxu0 %v2117
        %v2156 = vpop.f32.mrb[0].mxu0
        %v2157 = vadd.f32 0.0, %v2156
        %v2158 = vpop.f32.mrb[0].mxu0
        %v2159 = vpop.f32.mrb[0].mxu0
        %v2160 = vpop.f32.mrb[0].mxu0
        %2161 = vdwg.mxu0
        %v2163 = vsel %vm1464, %v2109, 0
        %v2166 = vsel %vm1464, %v1695, 0
        %2168 = vmatprep.subr.bf16.mxu0 0
        %2169 = vmatpush1.bf16.xpose.msra.mxu0 %v2166
        %2170 = vmatprep.subr.bf16.mxu0 0
        %2171 = vmatpush1.bf16.xpose.msra.mxu0 0
        %2172 = vmatprep.subr.bf16.mxu0 0
        %2173 = vmatpush1.bf16.xpose.msra.mxu0 0
        %2174 = vmatprep.subr.bf16.mxu0 0
        %2175 = vmatpush1.bf16.xpose.msra.mxu0 0
        %2176 = vmatprep.subr.bf16.mxu0 0
        %2177 = vmatpush1.bf16.xpose.msra.mxu0 0
        %2178 = vmatprep.subr.bf16.mxu0 0
        %2179 = vmatpush1.bf16.xpose.msra.mxu0 0
        %2180 = vmatprep.subr.bf16.mxu0 0
        %2181 = vmatpush1.bf16.xpose.msra.mxu0 0
        %2182 = vmatprep.subr.bf16.mxu0 0
        %2183 = vmatpush1.bf16.xpose.msra.mxu0 0
        %2184 = vmatprep.subr.bf16.mxu0 0
        %2185 = vmatpush1.bf16.xpose.msra.mxu0 0
        %2186 = vmatprep.subr.bf16.mxu0 0
        %2187 = vmatpush1.bf16.xpose.msra.mxu0 0
        %2188 = vmatprep.subr.bf16.mxu0 0
        %2189 = vmatpush1.bf16.xpose.msra.mxu0 0
        %2190 = vmatprep.subr.bf16.mxu0 0
        %2191 = vmatpush1.bf16.xpose.msra.mxu0 0
        %2192 = vmatprep.subr.bf16.mxu0 0
        %2193 = vmatpush1.bf16.xpose.msra.mxu0 0
        %2194 = vmatprep.subr.bf16.mxu0 0
        %2195 = vmatpush1.bf16.xpose.msra.mxu0 0
        %2196 = vmatprep.subr.bf16.mxu0 0
        %2197 = vmatpush1.bf16.xpose.msra.mxu0 0
        %2198 = vmatprep.subr.bf16.mxu0 0
        %2199 = vmatpush1.bf16.xpose.msra.mxu0 0
        %2200 = vmatprep.mubr.bf16.mxu0 0
        %2201 = vmatmul.mubr.bf16.gmra.mrb[0].mxu0 %v2163
        %v2202 = vpop.f32.mrb[0].mxu0
        %v2203 = vadd.f32 0.0, %v2202
        %v2204 = vpop.f32.mrb[0].mxu0
        %v2205 = vpop.f32.mrb[0].mxu0
        %v2206 = vpop.f32.mrb[0].mxu0
        %2207 = vdwg.mxu0
        %v2209 = vsel %vm1464, %v2112, 0
        %v2212 = vsel %vm1464, %v1696, 0
        %2214 = vmatprep.subr.bf16.mxu0 0
        %2215 = vmatpush1.bf16.xpose.msra.mxu0 %v2212
        %2216 = vmatprep.subr.bf16.mxu0 0
        %2217 = vmatpush1.bf16.xpose.msra.mxu0 0
        %2218 = vmatprep.subr.bf16.mxu0 0
        %2219 = vmatpush1.bf16.xpose.msra.mxu0 0
        %2220 = vmatprep.subr.bf16.mxu0 0
        %2221 = vmatpush1.bf16.xpose.msra.mxu0 0
        %2222 = vmatprep.subr.bf16.mxu0 0
        %2223 = vmatpush1.bf16.xpose.msra.mxu0 0
        %2224 = vmatprep.subr.bf16.mxu0 0
        %2225 = vmatpush1.bf16.xpose.msra.mxu0 0
        %2226 = vmatprep.subr.bf16.mxu0 0
        %2227 = vmatpush1.bf16.xpose.msra.mxu0 0
        %2228 = vmatprep.subr.bf16.mxu0 0
        %2229 = vmatpush1.bf16.xpose.msra.mxu0 0
        %2230 = vmatprep.subr.bf16.mxu0 0
        %2231 = vmatpush1.bf16.xpose.msra.mxu0 0
        %2232 = vmatprep.subr.bf16.mxu0 0
        %2233 = vmatpush1.bf16.xpose.msra.mxu0 0
        %2234 = vmatprep.subr.bf16.mxu0 0
        %2235 = vmatpush1.bf16.xpose.msra.mxu0 0
        %2236 = vmatprep.subr.bf16.mxu0 0
        %2237 = vmatpush1.bf16.xpose.msra.mxu0 0
        %2238 = vmatprep.subr.bf16.mxu0 0
        %2239 = vmatpush1.bf16.xpose.msra.mxu0 0
        %2240 = vmatprep.subr.bf16.mxu0 0
        %2241 = vmatpush1.bf16.xpose.msra.mxu0 0
        %2242 = vmatprep.subr.bf16.mxu0 0
        %2243 = vmatpush1.bf16.xpose.msra.mxu0 0
        %2244 = vmatprep.subr.bf16.mxu0 0
        %2245 = vmatpush1.bf16.xpose.msra.mxu0 0
        %2246 = vmatprep.mubr.bf16.mxu0 0
        %2247 = vmatmul.mubr.bf16.gmra.mrb[0].mxu0 %v2209
        %v2248 = vpop.f32.mrb[0].mxu0
        %v2249 = vadd.f32 0.0, %v2248
        %v2250 = vpop.f32.mrb[0].mxu0
        %v2251 = vpop.f32.mrb[0].mxu0
        %v2252 = vpop.f32.mrb[0].mxu0
        %2253 = vdwg.mxu0
        %v2255 = vsel %vm1464, %v2115, 0
        %v2258 = vsel %vm1464, %v1697, 0
        %2260 = vmatprep.subr.bf16.mxu0 0
        %2261 = vmatpush1.bf16.xpose.msra.mxu0 %v2258
        %2262 = vmatprep.subr.bf16.mxu0 0
        %2263 = vmatpush1.bf16.xpose.msra.mxu0 0
        %2264 = vmatprep.subr.bf16.mxu0 0
        %2265 = vmatpush1.bf16.xpose.msra.mxu0 0
        %2266 = vmatprep.subr.bf16.mxu0 0
        %2267 = vmatpush1.bf16.xpose.msra.mxu0 0
        %2268 = vmatprep.subr.bf16.mxu0 0
        %2269 = vmatpush1.bf16.xpose.msra.mxu0 0
        %2270 = vmatprep.subr.bf16.mxu0 0
        %2271 = vmatpush1.bf16.xpose.msra.mxu0 0
        %2272 = vmatprep.subr.bf16.mxu0 0
        %2273 = vmatpush1.bf16.xpose.msra.mxu0 0
        %2274 = vmatprep.subr.bf16.mxu0 0
        %2275 = vmatpush1.bf16.xpose.msra.mxu0 0
        %2276 = vmatprep.subr.bf16.mxu0 0
        %2277 = vmatpush1.bf16.xpose.msra.mxu0 0
        %2278 = vmatprep.subr.bf16.mxu0 0
        %2279 = vmatpush1.bf16.xpose.msra.mxu0 0
        %2280 = vmatprep.subr.bf16.mxu0 0
        %2281 = vmatpush1.bf16.xpose.msra.mxu0 0
        %2282 = vmatprep.subr.bf16.mxu0 0
        %2283 = vmatpush1.bf16.xpose.msra.mxu0 0
        %2284 = vmatprep.subr.bf16.mxu0 0
        %2285 = vmatpush1.bf16.xpose.msra.mxu0 0
        %2286 = vmatprep.subr.bf16.mxu0 0
        %2287 = vmatpush1.bf16.xpose.msra.mxu0 0
        %2288 = vmatprep.subr.bf16.mxu0 0
        %2289 = vmatpush1.bf16.xpose.msra.mxu0 0
        %2290 = vmatprep.subr.bf16.mxu0 0
        %2291 = vmatpush1.bf16.xpose.msra.mxu0 0
        %2292 = vmatprep.mubr.bf16.mxu0 0
        %2293 = vmatmul.mubr.bf16.gmra.mrb[0].mxu0 %v2255
        %v2294 = vpop.f32.mrb[0].mxu0
        %v2295 = vadd.f32 0.0, %v2294
        %v2296 = vpop.f32.mrb[0].mxu0
        %v2297 = vpop.f32.mrb[0].mxu0
        %v2298 = vpop.f32.mrb[0].mxu0
        %2299 = vdwg.mxu0
        %2300 = vxpose.xlu0.b32.start [1/16] %v2157, 128
        %2301 = vxpose.xlu0.b32.cont [2/16] 0.0, 128
        %2302 = vxpose.xlu0.b32.cont [3/16] 0.0, 128
        %2303 = vxpose.xlu0.b32.cont [4/16] 0.0, 128
        %2304 = vxpose.xlu0.b32.cont [5/16] 0.0, 128
        %2305 = vxpose.xlu0.b32.cont [6/16] 0.0, 128
        %2306 = vxpose.xlu0.b32.cont [7/16] 0.0, 128
        %2307 = vxpose.xlu0.b32.cont [8/16] 0.0, 128
        %2308 = vxpose.xlu0.b32.cont [9/16] 0.0, 128
        %2309 = vxpose.xlu0.b32.cont [10/16] 0.0, 128
        %2310 = vxpose.xlu0.b32.cont [11/16] 0.0, 128
        %2311 = vxpose.xlu0.b32.cont [12/16] 0.0, 128
        %2312 = vxpose.xlu0.b32.cont [13/16] 0.0, 128
        %2313 = vxpose.xlu0.b32.cont [14/16] 0.0, 128
        %2314 = vxpose.xlu0.b32.cont [15/16] 0.0, 128
        %2315 = vxpose.xlu0.b32.end [16/16] 0.0, 128
        %v2316 = vpop.trf.xlu0
        %v2317 = vpop.trf.xlu0
        %v2318 = vpop.trf.xlu0
        %v2319 = vpop.trf.xlu0
        %v2320 = vpop.trf.xlu0
        %v2321 = vpop.trf.xlu0
        %v2322 = vpop.trf.xlu0
        %v2323 = vpop.trf.xlu0
        %v2324 = vpop.trf.xlu0
        %v2325 = vpop.trf.xlu0
        %v2326 = vpop.trf.xlu0
        %v2327 = vpop.trf.xlu0
        %v2328 = vpop.trf.xlu0
        %v2329 = vpop.trf.xlu0
        %v2330 = vpop.trf.xlu0
        %v2331 = vpop.trf.xlu0
        %2332 = vxpose.xlu0.b32.start [1/16] %v2203, 128
        %2333 = vxpose.xlu0.b32.cont [2/16] 0.0, 128
        %2334 = vxpose.xlu0.b32.cont [3/16] 0.0, 128
        %2335 = vxpose.xlu0.b32.cont [4/16] 0.0, 128
        %2336 = vxpose.xlu0.b32.cont [5/16] 0.0, 128
        %2337 = vxpose.xlu0.b32.cont [6/16] 0.0, 128
        %2338 = vxpose.xlu0.b32.cont [7/16] 0.0, 128
        %2339 = vxpose.xlu0.b32.cont [8/16] 0.0, 128
        %2340 = vxpose.xlu0.b32.cont [9/16] 0.0, 128
        %2341 = vxpose.xlu0.b32.cont [10/16] 0.0, 128
        %2342 = vxpose.xlu0.b32.cont [11/16] 0.0, 128
        %2343 = vxpose.xlu0.b32.cont [12/16] 0.0, 128
        %2344 = vxpose.xlu0.b32.cont [13/16] 0.0, 128
        %2345 = vxpose.xlu0.b32.cont [14/16] 0.0, 128
        %2346 = vxpose.xlu0.b32.cont [15/16] 0.0, 128
        %2347 = vxpose.xlu0.b32.end [16/16] 0.0, 128
        %v2348 = vpop.trf.xlu0
        %v2349 = vpop.trf.xlu0
        %v2350 = vpop.trf.xlu0
        %v2351 = vpop.trf.xlu0
        %v2352 = vpop.trf.xlu0
        %v2353 = vpop.trf.xlu0
        %v2354 = vpop.trf.xlu0
        %v2355 = vpop.trf.xlu0
        %v2356 = vpop.trf.xlu0
        %v2357 = vpop.trf.xlu0
        %v2358 = vpop.trf.xlu0
        %v2359 = vpop.trf.xlu0
        %v2360 = vpop.trf.xlu0
        %v2361 = vpop.trf.xlu0
        %v2362 = vpop.trf.xlu0
        %v2363 = vpop.trf.xlu0
        %2364 = vxpose.xlu0.b32.start [1/16] %v2249, 128
        %2365 = vxpose.xlu0.b32.cont [2/16] 0.0, 128
        %2366 = vxpose.xlu0.b32.cont [3/16] 0.0, 128
        %2367 = vxpose.xlu0.b32.cont [4/16] 0.0, 128
        %2368 = vxpose.xlu0.b32.cont [5/16] 0.0, 128
        %2369 = vxpose.xlu0.b32.cont [6/16] 0.0, 128
        %2370 = vxpose.xlu0.b32.cont [7/16] 0.0, 128
        %2371 = vxpose.xlu0.b32.cont [8/16] 0.0, 128
        %2372 = vxpose.xlu0.b32.cont [9/16] 0.0, 128
        %2373 = vxpose.xlu0.b32.cont [10/16] 0.0, 128
        %2374 = vxpose.xlu0.b32.cont [11/16] 0.0, 128
        %2375 = vxpose.xlu0.b32.cont [12/16] 0.0, 128
        %2376 = vxpose.xlu0.b32.cont [13/16] 0.0, 128
        %2377 = vxpose.xlu0.b32.cont [14/16] 0.0, 128
        %2378 = vxpose.xlu0.b32.cont [15/16] 0.0, 128
        %2379 = vxpose.xlu0.b32.end [16/16] 0.0, 128
        %v2380 = vpop.trf.xlu0
        %v2381 = vpop.trf.xlu0
        %v2382 = vpop.trf.xlu0
        %v2383 = vpop.trf.xlu0
        %v2384 = vpop.trf.xlu0
        %v2385 = vpop.trf.xlu0
        %v2386 = vpop.trf.xlu0
        %v2387 = vpop.trf.xlu0
        %v2388 = vpop.trf.xlu0
        %v2389 = vpop.trf.xlu0
        %v2390 = vpop.trf.xlu0
        %v2391 = vpop.trf.xlu0
        %v2392 = vpop.trf.xlu0
        %v2393 = vpop.trf.xlu0
        %v2394 = vpop.trf.xlu0
        %v2395 = vpop.trf.xlu0
        %2396 = vxpose.xlu0.b32.start [1/16] %v2295, 128
        %2397 = vxpose.xlu0.b32.cont [2/16] 0.0, 128
        %2398 = vxpose.xlu0.b32.cont [3/16] 0.0, 128
        %2399 = vxpose.xlu0.b32.cont [4/16] 0.0, 128
        %2400 = vxpose.xlu0.b32.cont [5/16] 0.0, 128
        %2401 = vxpose.xlu0.b32.cont [6/16] 0.0, 128
        %2402 = vxpose.xlu0.b32.cont [7/16] 0.0, 128
        %2403 = vxpose.xlu0.b32.cont [8/16] 0.0, 128
        %2404 = vxpose.xlu0.b32.cont [9/16] 0.0, 128
        %2405 = vxpose.xlu0.b32.cont [10/16] 0.0, 128
        %2406 = vxpose.xlu0.b32.cont [11/16] 0.0, 128
        %2407 = vxpose.xlu0.b32.cont [12/16] 0.0, 128
        %2408 = vxpose.xlu0.b32.cont [13/16] 0.0, 128
        %2409 = vxpose.xlu0.b32.cont [14/16] 0.0, 128
        %2410 = vxpose.xlu0.b32.cont [15/16] 0.0, 128
        %2411 = vxpose.xlu0.b32.end [16/16] 0.0, 128
        %v2412 = vpop.trf.xlu0
        %v2413 = vpop.trf.xlu0
        %v2414 = vpop.trf.xlu0
        %v2415 = vpop.trf.xlu0
        %v2416 = vpop.trf.xlu0
        %v2417 = vpop.trf.xlu0
        %v2418 = vpop.trf.xlu0
        %v2419 = vpop.trf.xlu0
        %v2420 = vpop.trf.xlu0
        %v2421 = vpop.trf.xlu0
        %v2422 = vpop.trf.xlu0
        %v2423 = vpop.trf.xlu0
        %v2424 = vpop.trf.xlu0
        %v2425 = vpop.trf.xlu0
        %v2426 = vpop.trf.xlu0
        %v2427 = vpop.trf.xlu0
        %v2428 = vcombine.low %v2316, %v2380
        %v2429 = vcombine.high %v2316, %v2380
        %v2431 = vunpack.c.l.s4 1983009808
        %v2432 = vunpack.c.0.s8 %v2431
        %v2433 = vlaneseq
        %v2434 = vshrl.u32 %v2433, 7
        %v2435 = vsub.s32 %v2432, %v2434
        %v2436 = vrot.slane %v2428, %v2435
        %v2438 = vunpack.c.l.s4 1983009808
        %v2439 = vunpack.c.0.s8 %v2438
        %v2440 = vlaneseq
        %v2441 = vshrl.u32 %v2440, 7
        %v2442 = vsub.s32 %v2439, %v2441
        %v2443 = vrot.slane %v2429, %v2442
        %v2444 = vcombine.low %v2348, %v2412
        %v2445 = vcombine.high %v2348, %v2412
        %v2447 = vunpack.c.l.s4 1983009808
        %v2448 = vunpack.c.0.s8 %v2447
        %v2449 = vlaneseq
        %v2450 = vshrl.u32 %v2449, 7
        %v2451 = vsub.s32 %v2448, %v2450
        %v2452 = vrot.slane %v2444, %v2451
        %v2454 = vunpack.c.l.s4 1983009808
        %v2455 = vunpack.c.0.s8 %v2454
        %v2456 = vlaneseq
        %v2457 = vshrl.u32 %v2456, 7
        %v2458 = vsub.s32 %v2455, %v2457
        %v2459 = vrot.slane %v2445, %v2458
        %v2460 = vcombine.low %v2436, %v2452
        %v2461 = vcombine.high %v2436, %v2452
        %v2463 = vunpack.c.l.s4 1934713408
        %v2464 = vunpack.c.0.s8 %v2463
        %v2465 = vlaneseq
        %v2466 = vshrl.u32 %v2465, 7
        %v2467 = vsub.s32 %v2464, %v2466
        %v2468 = vrot.slane %v2460, %v2467
        %v2470 = vunpack.c.l.s4 1934713408
        %v2471 = vunpack.c.0.s8 %v2470
        %v2472 = vlaneseq
        %v2473 = vshrl.u32 %v2472, 7
        %v2474 = vsub.s32 %v2471, %v2473
        %v2475 = vrot.slane %v2461, %v2474
        %v2476 = vcombine.low %v2443, %v2459
        %v2477 = vcombine.high %v2443, %v2459
        %v2479 = vunpack.c.l.s4 1934713408
        %v2480 = vunpack.c.0.s8 %v2479
        %v2481 = vlaneseq
        %v2482 = vshrl.u32 %v2481, 7
        %v2483 = vsub.s32 %v2480, %v2482
        %v2484 = vrot.slane %v2476, %v2483
        %v2486 = vunpack.c.l.s4 1934713408
        %v2487 = vunpack.c.0.s8 %v2486
        %v2488 = vlaneseq
        %v2489 = vshrl.u32 %v2488, 7
        %v2490 = vsub.s32 %v2487, %v2489
        %v2491 = vrot.slane %v2477, %v2490
        %v2492 = vcombine.high %v2468, 0.0
        %v2493 = vcombine.high %v2475, 0.0
        %v2494 = vcombine.high %v2484, 0.0
        %v2495 = vcombine.high %v2491, 0.0
        %v2496 = vcombine.low %v2468, %v2475
        %v2498 = vunpack.c.l.s4 1983009808
        %v2499 = vunpack.c.0.s8 %v2498
        %v2500 = vlaneseq
        %v2501 = vshrl.u32 %v2500, 7
        %v2502 = vsub.s32 %v2499, %v2501
        %v2503 = vrot.slane %v2496, %v2502
        %v2504 = vcombine.low %v2492, %v2493
        %v2506 = vunpack.c.l.s4 1983009808
        %v2507 = vunpack.c.0.s8 %v2506
        %v2508 = vlaneseq
        %v2509 = vshrl.u32 %v2508, 7
        %v2510 = vsub.s32 %v2507, %v2509
        %v2511 = vrot.slane %v2504, %v2510
        %v2512 = vcombine.low %v2484, %v2491
        %v2514 = vunpack.c.l.s4 1983009808
        %v2515 = vunpack.c.0.s8 %v2514
        %v2516 = vlaneseq
        %v2517 = vshrl.u32 %v2516, 7
        %v2518 = vsub.s32 %v2515, %v2517
        %v2519 = vrot.slane %v2512, %v2518
        %v2520 = vcombine.low %v2494, %v2495
        %v2522 = vunpack.c.l.s4 1983009808
        %v2523 = vunpack.c.0.s8 %v2522
        %v2524 = vlaneseq
        %v2525 = vshrl.u32 %v2524, 7
        %v2526 = vsub.s32 %v2523, %v2525
        %v2527 = vrot.slane %v2520, %v2526
        %v2528 = vcombine.low %v2503, %v2511
        %v2529 = vcombine.high %v2503, %v2511
        %v2531 = vunpack.c.l.s4 1934713408
        %v2532 = vunpack.c.0.s8 %v2531
        %v2533 = vlaneseq
        %v2534 = vshrl.u32 %v2533, 7
        %v2535 = vsub.s32 %v2532, %v2534
        %v2536 = vrot.slane %v2528, %v2535
        %v2538 = vunpack.c.l.s4 1934713408
        %v2539 = vunpack.c.0.s8 %v2538
        %v2540 = vlaneseq
        %v2541 = vshrl.u32 %v2540, 7
        %v2542 = vsub.s32 %v2539, %v2541
        %v2543 = vrot.slane %v2529, %v2542
        %v2544 = vcombine.low %v2519, %v2527
        %v2545 = vcombine.high %v2519, %v2527
        %v2547 = vunpack.c.l.s4 1934713408
        %v2548 = vunpack.c.0.s8 %v2547
        %v2549 = vlaneseq
        %v2550 = vshrl.u32 %v2549, 7
        %v2551 = vsub.s32 %v2548, %v2550
        %v2552 = vrot.slane %v2544, %v2551
        %v2554 = vunpack.c.l.s4 1934713408
        %v2555 = vunpack.c.0.s8 %v2554
        %v2556 = vlaneseq
        %v2557 = vshrl.u32 %v2556, 7
        %v2558 = vsub.s32 %v2555, %v2557
        %v2559 = vrot.slane %v2545, %v2558
        %v2560 = vcombine.low %v2536, %v2552
        %v2561 = vcombine.high %v2536, %v2552
        %v2562 = vcombine.low %v2543, %v2559
        %v2563 = vcombine.high %v2543, %v2559
        %2565 = vrot.lane.b32.xlu0 %v2561, 8
        %v2566 = vpop.permute.xlu0 %2565
        %2569 = vrot.lane.b32.xlu0 %v2562, 16
        %v2570 = vpop.permute.xlu0 %2569
        %2573 = vrot.lane.b32.xlu0 %v2563, 24
        %v2574 = vpop.permute.xlu0 %2573
        %v2576 = vsel %vm1464, %v2560, %v2566
        %vm2577 = vcmask 130048
        %v2578 = vsel %vm2577, %v2576, %v2570
        %vm2579 = vcmask 195584
        %v2580 = vsel %vm2579, %v2578, %v2574
        %v2581 = vpack.c.bf16 %v2580, %v2580
        %v2582 = vld [vmem:[%s613] sm:$0xf]
        %v2583 = vld [vmem:[%s613 + $0x4] sm:$0xf]
        %v2584 = vld [vmem:[%s613 + $0x8] sm:$0xf]
        %v2585 = vld [vmem:[%s613 + $0xc] sm:$0xf]
        %v2590 = vunpack.c.l.b16 %v2582
        %v2591 = vunpack.c.l.b16 %v2583
        %v2592 = vunpack.c.l.b16 %v2584
        %v2593 = vunpack.c.l.b16 %v2585
        %v2594 = vpack.c.b16 %v2591, %v2590
        %v2595 = vpack.c.b16 %v2593, %v2592
        %v2599 = vsel %vm670, %v2581, 0
        %2601 = vmatprep.subr.bf16.mxu0 0
        %2602 = vmatpush1.bf16.msra.mxu0 %v2594
        %2603 = vmatprep.subr.bf16.mxu0 0
        %2604 = vmatpush1.bf16.msra.mxu0 %v2595
        %2605 = vmatprep.subr.bf16.mxu0 0
        %2606 = vmatpush1.bf16.msra.mxu0 0
        %2607 = vmatprep.subr.bf16.mxu0 0
        %2608 = vmatpush1.bf16.msra.mxu0 0
        %2609 = vmatprep.subr.bf16.mxu0 0
        %2610 = vmatpush1.bf16.msra.mxu0 0
        %2611 = vmatprep.subr.bf16.mxu0 0
        %2612 = vmatpush1.bf16.msra.mxu0 0
        %2613 = vmatprep.subr.bf16.mxu0 0
        %2614 = vmatpush1.bf16.msra.mxu0 0
        %2615 = vmatprep.subr.bf16.mxu0 0
        %2616 = vmatpush1.bf16.msra.mxu0 0
        %2617 = vmatprep.subr.bf16.mxu0 0
        %2618 = vmatpush1.bf16.msra.mxu0 0
        %2619 = vmatprep.subr.bf16.mxu0 0
        %2620 = vmatpush1.bf16.msra.mxu0 0
        %2621 = vmatprep.subr.bf16.mxu0 0
        %2622 = vmatpush1.bf16.msra.mxu0 0
        %2623 = vmatprep.subr.bf16.mxu0 0
        %2624 = vmatpush1.bf16.msra.mxu0 0
        %2625 = vmatprep.subr.bf16.mxu0 0
        %2626 = vmatpush1.bf16.msra.mxu0 0
        %2627 = vmatprep.subr.bf16.mxu0 0
        %2628 = vmatpush1.bf16.msra.mxu0 0
        %2629 = vmatprep.subr.bf16.mxu0 0
        %2630 = vmatpush1.bf16.msra.mxu0 0
        %2631 = vmatprep.subr.bf16.mxu0 0
        %2632 = vmatpush1.bf16.msra.mxu0 0
        %2633 = vmatprep.mubr.bf16.mxu0 0
        %2634 = vmatmul.mubr.bf16.gmra.mrb[0].mxu0 %v2599
        %v2635 = vpop.f32.mrb[0].mxu0
        %v2636 = vadd.f32 %v650, %v2635
        %v2637 = vpop.f32.mrb[0].mxu0
        %v2638 = vpop.f32.mrb[0].mxu0
        %v2639 = vpop.f32.mrb[0].mxu0
        %2640 = vdwg.mxu0
        %v2641 = vld [vmem:[%s616] sm:$0x1]
        %v2642 = vld [vmem:[%s619] sm:$0x1]
        %v2643 = vsel %vm670, %v2636, 0.0
        %2644 = vadd.xlane.f32.xlu0 %v2643
        %v2645 = vpop.xlane.xlu0 %2644
        %v2646 = vrcp.pop 32.0
        %v2647 = vmul.f32 %v2645, %v2646
        %v2648 = vsub.f32 %v2636, %v2647
        %v2649 = vmul.f32 %v2648, %v2648
        %v2650 = vsel %vm670, %v2649, 0.0
        %2651 = vadd.xlane.f32.xlu0 %v2650
        %v2652 = vpop.xlane.xlu0 %2651
        %v2653 = vmul.f32 %v2652, %v2646
        %v2654 = vadd.f32 %v2653, 1e-06
        %v2655 = vrsqrt.pop %v2654
        %v2656 = vmul.f32 %v2648, %v2655
        %v2658 = vlaneseq
        %v2659 = vshrl.u32 %v2658, 7
        %v2660 = vsub.s32 0, %v2659
        %v2661 = vrot.slane %v2641, %v2660
        %v2663 = vmul.f32 %v2656, %v2661
        %v2665 = vlaneseq
        %v2666 = vshrl.u32 %v2665, 7
        %v2667 = vsub.s32 0, %v2666
        %v2668 = vrot.slane %v2642, %v2667
        %v2670 = vadd.f32 %v2663, %v2668
        %v2671 = vpack.c.bf16 %v2670, %v2670
        %v2672 = vld [vmem:[%s624] sm:$0xf]
        %v2673 = vld [vmem:[%s624 + $0x4] sm:$0xf]
        %v2674 = vld [vmem:[%s624 + $0x8] sm:$0xf]
        %v2675 = vld [vmem:[%s624 + $0xc] sm:$0xf]
        %v2676 = vld [vmem:[%s627] sm:$0x1]
        %v2678 = vlaneseq
        %v2679 = vshrl.u32 %v2678, 7
        %v2680 = vsub.s32 0, %v2679
        %v2681 = vrot.slane %v2676, %v2680
        %v2687 = vunpack.c.l.b16 %v2672
        %v2688 = vunpack.c.l.b16 %v2673
        %v2689 = vunpack.c.l.b16 %v2674
        %v2690 = vunpack.c.l.b16 %v2675
        %v2691 = vpack.c.b16 %v2688, %v2687
        %v2692 = vpack.c.b16 %v2690, %v2689
        %v2696 = vsel %vm670, %v2671, 0
        %2698 = vmatprep.subr.bf16.mxu0 0
        %2699 = vmatpush1.bf16.msra.mxu0 %v2691
        %2700 = vmatprep.subr.bf16.mxu0 0
        %2701 = vmatpush1.bf16.msra.mxu0 %v2692
        %2702 = vmatprep.subr.bf16.mxu0 0
        %2703 = vmatpush1.bf16.msra.mxu0 0
        %2704 = vmatprep.subr.bf16.mxu0 0
        %2705 = vmatpush1.bf16.msra.mxu0 0
        %2706 = vmatprep.subr.bf16.mxu0 0
        %2707 = vmatpush1.bf16.msra.mxu0 0
        %2708 = vmatprep.subr.bf16.mxu0 0
        %2709 = vmatpush1.bf16.msra.mxu0 0
        %2710 = vmatprep.subr.bf16.mxu0 0
        %2711 = vmatpush1.bf16.msra.mxu0 0
        %2712 = vmatprep.subr.bf16.mxu0 0
        %2713 = vmatpush1.bf16.msra.mxu0 0
        %2714 = vmatprep.subr.bf16.mxu0 0
        %2715 = vmatpush1.bf16.msra.mxu0 0
        %2716 = vmatprep.subr.bf16.mxu0 0
        %2717 = vmatpush1.bf16.msra.mxu0 0
        %2718 = vmatprep.subr.bf16.mxu0 0
        %2719 = vmatpush1.bf16.msra.mxu0 0
        %2720 = vmatprep.subr.bf16.mxu0 0
        %2721 = vmatpush1.bf16.msra.mxu0 0
        %2722 = vmatprep.subr.bf16.mxu0 0
        %2723 = vmatpush1.bf16.msra.mxu0 0
        %2724 = vmatprep.subr.bf16.mxu0 0
        %2725 = vmatpush1.bf16.msra.mxu0 0
        %2726 = vmatprep.subr.bf16.mxu0 0
        %2727 = vmatpush1.bf16.msra.mxu0 0
        %2728 = vmatprep.subr.bf16.mxu0 0
        %2729 = vmatpush1.bf16.msra.mxu0 0
        %2730 = vmatprep.mubr.bf16.mxu0 0
        %2731 = vmatmul.mubr.bf16.gmra.mrb[0].mxu0 %v2696
        %v2732 = vpop.f32.mrb[0].mxu0
        %v2733 = vadd.f32 %v2681, %v2732
        %v2734 = vpop.f32.mrb[0].mxu0
        %v2735 = vpop.f32.mrb[0].mxu0
        %v2736 = vpop.f32.mrb[0].mxu0
        %2737 = vdwg.mxu0
        %v2738 = vmax.f32 %v2733, 0.0
        %v2739 = vpack.c.bf16 %v2738, %v2738
        %v2740 = vld [vmem:[%s632] sm:$0xf]
        %v2741 = vld [vmem:[%s632 + $0x4] sm:$0xf]
        %v2742 = vld [vmem:[%s632 + $0x8] sm:$0xf]
        %v2743 = vld [vmem:[%s632 + $0xc] sm:$0xf]
        %v2744 = vld [vmem:[%s632 + $0x10] sm:$0xf]
        %v2745 = vld [vmem:[%s632 + $0x14] sm:$0xf]
        %v2746 = vld [vmem:[%s632 + $0x18] sm:$0xf]
        %v2747 = vld [vmem:[%s632 + $0x1c] sm:$0xf]
        %v2748 = vld [vmem:[%s635] sm:$0x1]
        %v2750 = vlaneseq
        %v2751 = vshrl.u32 %v2750, 7
        %v2752 = vsub.s32 0, %v2751
        %v2753 = vrot.slane %v2748, %v2752
        %v2763 = vunpack.c.l.b16 %v2740
        %v2764 = vunpack.c.l.b16 %v2741
        %v2765 = vunpack.c.l.b16 %v2742
        %v2766 = vunpack.c.l.b16 %v2743
        %v2767 = vunpack.c.l.b16 %v2744
        %v2768 = vunpack.c.l.b16 %v2745
        %v2769 = vunpack.c.l.b16 %v2746
        %v2770 = vunpack.c.l.b16 %v2747
        %v2771 = vpack.c.b16 %v2764, %v2763
        %v2772 = vpack.c.b16 %v2766, %v2765
        %v2773 = vpack.c.b16 %v2768, %v2767
        %v2774 = vpack.c.b16 %v2770, %v2769
        %vm2779 = vcmask 523264
        %v2781 = vsel %vm2779, %v2739, 0
        %2783 = vmatprep.subr.bf16.mxu0 0
        %2784 = vmatpush1.bf16.msra.mxu0 %v2771
        %2785 = vmatprep.subr.bf16.mxu0 0
        %2786 = vmatpush1.bf16.msra.mxu0 %v2772
        %2787 = vmatprep.subr.bf16.mxu0 0
        %2788 = vmatpush1.bf16.msra.mxu0 %v2773
        %2789 = vmatprep.subr.bf16.mxu0 0
        %2790 = vmatpush1.bf16.msra.mxu0 %v2774
        %2791 = vmatprep.subr.bf16.mxu0 0
        %2792 = vmatpush1.bf16.msra.mxu0 0
        %2793 = vmatprep.subr.bf16.mxu0 0
        %2794 = vmatpush1.bf16.msra.mxu0 0
        %2795 = vmatprep.subr.bf16.mxu0 0
        %2796 = vmatpush1.bf16.msra.mxu0 0
        %2797 = vmatprep.subr.bf16.mxu0 0
        %2798 = vmatpush1.bf16.msra.mxu0 0
        %2799 = vmatprep.subr.bf16.mxu0 0
        %2800 = vmatpush1.bf16.msra.mxu0 0
        %2801 = vmatprep.subr.bf16.mxu0 0
        %2802 = vmatpush1.bf16.msra.mxu0 0
        %2803 = vmatprep.subr.bf16.mxu0 0
        %2804 = vmatpush1.bf16.msra.mxu0 0
        %2805 = vmatprep.subr.bf16.mxu0 0
        %2806 = vmatpush1.bf16.msra.mxu0 0
        %2807 = vmatprep.subr.bf16.mxu0 0
        %2808 = vmatpush1.bf16.msra.mxu0 0
        %2809 = vmatprep.subr.bf16.mxu0 0
        %2810 = vmatpush1.bf16.msra.mxu0 0
        %2811 = vmatprep.subr.bf16.mxu0 0
        %2812 = vmatpush1.bf16.msra.mxu0 0
        %2813 = vmatprep.subr.bf16.mxu0 0
        %2814 = vmatpush1.bf16.msra.mxu0 0
        %2815 = vmatprep.mubr.bf16.mxu0 0
        %2816 = vmatmul.mubr.bf16.gmra.mrb[0].mxu0 %v2781
        %v2817 = vpop.f32.mrb[0].mxu0
        %v2818 = vadd.f32 %v2753, %v2817
        %v2819 = vpop.f32.mrb[0].mxu0
        %v2820 = vpop.f32.mrb[0].mxu0
        %v2821 = vpop.f32.mrb[0].mxu0
        %2822 = vdwg.mxu0
        %v2823 = vadd.f32 %v2818, %v2670
        %v2824 = vld [vmem:[%s638] sm:$0x1]
        %v2825 = vld [vmem:[%s641] sm:$0x1]
        %v2826 = vsel %vm670, %v2823, 0.0
        %2827 = vadd.xlane.f32.xlu0 %v2826
        %v2828 = vpop.xlane.xlu0 %2827
        %v2829 = vmul.f32 %v2828, %v2646
        %v2830 = vsub.f32 %v2823, %v2829
        %v2831 = vmul.f32 %v2830, %v2830
        %v2832 = vsel %vm670, %v2831, 0.0
        %2833 = vadd.xlane.f32.xlu0 %v2832
        %v2834 = vpop.xlane.xlu0 %2833
        %v2835 = vmul.f32 %v2834, %v2646
        %v2836 = vadd.f32 %v2835, 1e-06
        %v2837 = vrsqrt.pop %v2836
        %v2838 = vmul.f32 %v2830, %v2837
        %v2840 = vlaneseq
        %v2841 = vshrl.u32 %v2840, 7
        %v2842 = vsub.s32 0, %v2841
        %v2843 = vrot.slane %v2824, %v2842
        %v2845 = vmul.f32 %v2838, %v2843
        %v2847 = vlaneseq
        %v2848 = vshrl.u32 %v2847, 7
        %v2849 = vsub.s32 0, %v2848
        %v2850 = vrot.slane %v2825, %v2849
        %v2852 = vadd.f32 %v2845, %v2850
        %2853 = vst.msk [vmem:[#allocation2] sm:$0xff] %vm670, %v2852
        %p2854 = scmp.eq.s32.totalorder %s37, 1
        // Predicated region
        $region81: #{tpu_custom_call.1} parent=67 // pred_check
          %p2855 = pneg %p2854
        $region82: #{tpu_custom_call.1} parent=67 // pred_check_branch
          %2857 = sbr.rel (%p2855) target = $region84
        $region83: #{tpu_custom_call.1} parent=67 // pred_region
          %2858 = vst.msk [vmem:[%s603] sm:$0xff] %vm670, %v2852
        $region84: #{tpu_custom_call.1} parent=67 // pred_fallthru
          _
        %s2859 = sand.u32 %s364, 1
        %s2860 = scalar_lea.sflag [#allocation5], %s2859
        %s2861 = sand.u32 %s364, 1
        %s2862 = smul.addr %s2861, 8
        %s2863 = scalar_lea.vmem [#allocation8], %s2862
        // Predicated region
        $region85: #{tpu_custom_call.1} parent=67 // pred_check
          %p2864 = pneg %p374
        $region86: #{tpu_custom_call.1} parent=67 // pred_check_branch
          %2866 = sbr.rel (%p2864) target = $region88
        $region87: #{tpu_custom_call.1} parent=67 // pred_region
          %s2868 = ssub.s32 128, 128
          %2869 = vsyncadd %s2860, %s2868
          %s2870 = smul.addr %s36, 128
          %s2871 = scalar_lea.hbm %s12, %s2870
          %s2873 = sshll.u32 %s2863, 4
          %s2874 = int_to_ptr.vmem [resolvable:$true] %s2873
          %2876 = dma.vmem_to_hbm [thread:$0]  %s2874, 128, %s2871, %s2860
        $region88: #{tpu_custom_call.1} parent=67 // pred_fallthru
          _
      $region68: #{tpu_custom_call.1} parent=5 // pred_fallthru
        _
      %p2877 = scmp.le.s32.totalorder 2, %s27
      // Predicated region
      $region89: #{tpu_custom_call.1} parent=5 // pred_check
        %p2878 = pneg %p2877
      $region90: #{tpu_custom_call.1} parent=5 // pred_check_branch
        %2880 = sbr.rel (%p2878) target = $region92
      $region91: #{tpu_custom_call.1} parent=5 // pred_region
        %s2881 = ssub.s32 %s27, 2
        // Predicated region
        $region93: #{tpu_custom_call.1} parent=91 // pred_check
          %p2882 = pneg %p380
        $region94: #{tpu_custom_call.1} parent=91 // pred_check_branch
          %2884 = sbr.rel (%p2882) target = $region96
        $region95: #{tpu_custom_call.1} parent=91 // pred_region
          %s2885 = sand.u32 %s365, 1
          %s2886 = scalar_lea.sflag [#allocation5], %s2885
          %s2887 = sand.u32 %s365, 1
          %s2888 = smul.addr %s2887, 8
          %s2889 = scalar_lea.vmem [#allocation8], %s2888
          %2890 = dma.done %s2886, 128
        $region96: #{tpu_custom_call.1} parent=91 // pred_fallthru
          _
      $region92: #{tpu_custom_call.1} parent=5 // pred_fallthru
        _
    $region6: #{tpu_custom_call.1} parent=1 // loop_footer
      %s31 = sadd.s32 1, %s27
    $region7: #{tpu_custom_call.1} parent=1 // loop_footer_branch
      %26 = sbr.rel target = $region3
    $region8: #{tpu_custom_call.1} parent=1 // loop_exit
      _
    %2891 = vsyncpa [#allocation4], 1
    %s2892 = scalar_lea.sflag [#allocation4], 1
    %2893 = vsyncpa %s2892, 1
    %2894 = vsyncpa [#allocation7], 1
    %s2895 = scalar_lea.sflag [#allocation7], 1
    %2896 = vsyncpa %s2895, 1
    %2897 = vsyncpa [#allocation5], 1
    %s2898 = scalar_lea.sflag [#allocation5], 1
    %2899 = vsyncpa %s2898, 1

</llo_original>
